<compile_context>
chip_gen: v5e
topology: v5e:2x2
jax: 0.10.0
libtpu: 0.0.40
codegen_flags: <defaults>
</compile_context>

<pallas_src>
import functools
import math

import jax
import jax.numpy as jnp
from jax import lax
from jax.experimental import pallas as pl
from jax.experimental.pallas import tpu as pltpu

# ----------------------------- model dims (small, synthetic) -----------------
B = 2            # batch
IMG = 16         # image H = W
PATCH = 2        # patch size (VAE-analog downsample factor)
LAT = IMG // PATCH          # latent spatial = 8
LAT_C = 4                   # latent channels
UNET_CIN = 2 * LAT_C        # concat(noise latent, image latent) = 8
NTOK = LAT * LAT            # 64 latent tokens
AU_DIM = 12                 # action-unit diff feature dim
SEQ = 8                     # prompt-embed sequence length
HID = 32                    # prompt / unet hidden dim
FF = 64                     # feed-forward dim
STEPS = 50                  # num_inference_steps = 50

F32 = jnp.float32


# ----------------------------- fused denoise kernel --------------------------
def _denoise_kernel(dsig_ref, z0_ref, lat_ref, prm_ref, temb_ref,
                    wz_ref, wl_ref, bin_ref,
                    wq_ref, wk_ref, wv_ref, wo_ref,
                    w1_ref, b1_ref, w2_ref, b2_ref,
                    wout_ref, bout_ref,
                    zf_ref):
    """All 50 Euler/UNet steps for one batch element; everything stays in VMEM.

    Layout: channels on sublanes, tokens on lanes.
      z, eps : (LAT_C, NTOK)   h : (HID, NTOK)   scores : (SEQ, NTOK)
    """
    dot = functools.partial(jnp.dot, preferred_element_type=jnp.float32)

    lat = lat_ref[0]                       # (LAT_C, NTOK) image latent
    p_t = prm_ref[0]                       # (HID, SEQ)    prompt embeds (T)
    temb_t = temb_ref[...]                 # (HID, STEPS)  timestep table (T)

    # loop-invariant work hoisted out of the 50-step loop
    k = dot(wk_ref[...], p_t)              # (HID, SEQ)
    v = dot(wv_ref[...], p_t)              # (HID, SEQ)
    h_img = dot(wl_ref[...], lat) + bin_ref[...]   # (HID, NTOK)

    wz = wz_ref[...]
    wq = wq_ref[...]
    wo = wo_ref[...]
    w1 = w1_ref[...]
    b1 = b1_ref[...]
    w2 = w2_ref[...]
    b2 = b2_ref[...]
    wout = wout_ref[...]
    bout = bout_ref[...]
    scale = 1.0 / math.sqrt(HID)

    def step(i, z):
        # timestep-embedding column (HID, 1): one-hot matvec (avoids relayout)
        onehot = (lax.broadcasted_iota(jnp.int32, (STEPS, 1), 0) == i).astype(F32)
        t_col = dot(temb_t, onehot)                           # (HID, 1)

        # in-projection (concat([z, img_lat]) folded into two matmuls) + temb
        h = dot(wz, z) + h_img + t_col                        # (HID, NTOK)

        # cross-attention: queries = latent tokens, keys/values = prompt
        q = dot(wq, h)                                        # (HID, NTOK)
        s = lax.dot_general(k, q, (((0,), (0,)), ((), ())),
                            preferred_element_type=jnp.float32) * scale  # (SEQ, NTOK)
        s = s - jnp.max(s, axis=0, keepdims=True)
        e = jnp.exp(s)
        a = e * pl.reciprocal(jnp.sum(e, axis=0, keepdims=True), approx=True)
        h = h + dot(wo, dot(v, a))                            # (HID, NTOK)

        # feed-forward
        f = jax.nn.gelu(dot(w1, h) + b1)                      # (FF, NTOK)
        h = h + dot(w2, f) + b2

        # epsilon prediction + Euler update  z <- z + (sigma[i+1]-sigma[i])*eps
        eps = dot(wout, h) + bout                             # (LAT_C, NTOK)
        return z + dsig_ref[i] * eps

    zf_ref[0] = lax.fori_loop(0, STEPS, step, z0_ref[0])


def denoise(dsig, z0_t, img_lat_t, prompt_t, temb_t, p):
    def shared(a):
        shape = a.shape
        return pl.BlockSpec(shape, lambda b, _n=len(shape): (0,) * _n)

    def per_batch(shape):
        return pl.BlockSpec(shape, lambda b: (b,) + (0,) * (len(shape) - 1))

    wz = p["w_in"][:LAT_C, :].T            # (HID, LAT_C)  acts on z
    wl = p["w_in"][LAT_C:, :].T            # (HID, LAT_C)  acts on image latent
    args = (
        dsig, z0_t, img_lat_t, prompt_t, temb_t,
        wz, wl, p["b_in"].reshape(HID, 1),
        p["wq"].T, p["wk"].T, p["wv"].T, p["wo"].T,
        p["w1"].T, p["b1"].reshape(FF, 1),
        p["w2"].T, p["b2"].reshape(HID, 1),
        p["w_out"].T, p["b_out"].reshape(LAT_C, 1),
    )
    in_specs = [
        pl.BlockSpec(memory_space=pltpu.MemorySpace.SMEM),     # dsig (STEPS,)
        per_batch((1, LAT_C, NTOK)),                           # z0
        per_batch((1, LAT_C, NTOK)),                           # image latent
        per_batch((1, HID, SEQ)),                              # prompt (T)
    ] + [shared(a) for a in args[4:]]                          # temb + weights

    return pl.pallas_call(
        _denoise_kernel,
        out_shape=jax.ShapeDtypeStruct((B, LAT_C, NTOK), F32),
        grid=(B,),
        in_specs=in_specs,
        out_specs=per_batch((1, LAT_C, NTOK)),
        compiler_params=pltpu.CompilerParams(
            dimension_semantics=("parallel",)),                # 2 TCs on v7x
    )(*args)


# ----------------------------- glue (plain JAX / XLA) -------------------------
def patchify(src_nchw):
    # (B,3,IMG,IMG) NCHW -> (B, NTOK, PATCH*PATCH*3)
    x = jnp.transpose(src_nchw, (0, 2, 3, 1))                  # NHWC
    x = x.reshape(B, LAT, PATCH, LAT, PATCH, 3)
    x = jnp.transpose(x, (0, 1, 3, 2, 4, 5))
    return x.reshape(B, NTOK, PATCH * PATCH * 3)


def unpatchify(tok):
    # (B, NTOK, PATCH*PATCH*3) -> (B, IMG, IMG, 3) NHWC
    x = tok.reshape(B, LAT, LAT, PATCH, PATCH, 3)
    x = jnp.transpose(x, (0, 1, 3, 2, 4, 5))
    return x.reshape(B, IMG, IMG, 3)


def init_params(key):
    def dense(k, shape):
        return jax.random.normal(k, shape, F32) / math.sqrt(shape[0])

    ks = jax.random.split(key, 16)
    return {
        "au_w": dense(ks[0], (AU_DIM, SEQ * HID)),
        "au_b": jnp.zeros((SEQ * HID,), F32),
        "enc_w": dense(ks[1], (PATCH * PATCH * 3, LAT_C)),
        "enc_b": jnp.zeros((LAT_C,), F32),
        "dec_w": dense(ks[2], (LAT_C, PATCH * PATCH * 3)),
        "dec_b": jnp.zeros((PATCH * PATCH * 3,), F32),
        "w_in": dense(ks[3], (UNET_CIN, HID)),
        "b_in": jnp.zeros((HID,), F32),
        "wq": dense(ks[4], (HID, HID)),
        "wk": dense(ks[5], (HID, HID)),
        "wv": dense(ks[6], (HID, HID)),
        "wo": dense(ks[7], (HID, HID)),
        "w1": dense(ks[8], (HID, FF)),
        "b1": jnp.zeros((FF,), F32),
        "w2": dense(ks[9], (FF, HID)),
        "b2": jnp.zeros((HID,), F32),
        "w_out": dense(ks[10], (HID, LAT_C)),
        "b_out": jnp.zeros((LAT_C,), F32),
        "temb_w": dense(ks[11], (HID, HID)),
    }


@jax.jit
def au_pix2pix_pipeline(source_images, au_diffs, noise, params):
    # 1) au_processor: AU diffs -> prompt embeddings (tiny matmul -> XLA)
    pe = au_diffs @ params["au_w"] + params["au_b"]                # (B, SEQ*HID)
    prompt_t = jnp.transpose(pe.reshape(B, SEQ, HID), (0, 2, 1))   # (B, HID, SEQ)

    # 2) VAE-analog encode of the source image -> conditioning latent tokens
    patches = patchify(source_images)                              # (B, NTOK, 12)
    img_lat = patches @ params["enc_w"] + params["enc_b"]          # (B, NTOK, 4)
    img_lat_t = jnp.transpose(img_lat, (0, 2, 1))                  # (B, 4, NTOK)

    # 3) sinusoidal timestep embeddings, projected; transposed for the kernel
    t = jnp.arange(STEPS, dtype=F32)[:, None]
    freqs = jnp.exp(
        -jnp.arange(HID // 2, dtype=F32) * (math.log(10000.0) / (HID // 2))
    )[None, :]
    sincos = jnp.concatenate([jnp.sin(t * freqs), jnp.cos(t * freqs)], axis=-1)
    temb_t = (sincos @ params["temb_w"]).T                         # (HID, STEPS)

    # 4) Euler schedule (guidance_scale == 1.0 -> no CFG, one UNet pass/step)
    sigmas = jnp.linspace(1.0, 0.0, STEPS + 1).astype(F32)
    dsig = sigmas[1:] - sigmas[:-1]                                # (STEPS,)

    # 5) fused persistent 50-step denoise kernel (all state resident in VMEM)
    z0_t = jnp.transpose(noise, (0, 2, 1))                         # (B, 4, NTOK)
    zf_t = denoise(dsig, z0_t, img_lat_t, prompt_t, temb_t, params)
    z = jnp.transpose(zf_t, (0, 2, 1))                             # (B, NTOK, 4)

    # 6) VAE-analog decode -> image, then the out.images[0] selection
    dec = z @ params["dec_w"] + params["dec_b"]                    # (B, NTOK, 12)
    images = unpatchify(dec)
    images = jnp.clip(images * 0.5 + 0.5, 0.0, 1.0)                # (B,IMG,IMG,3)
    return images[0]                                               # first image


# ----------------------------- main -------------------------------------------
if __name__ == "__main__":
    root = jax.random.PRNGKey(0)
    k_src, k_au, k_noise, k_params = jax.random.split(root, 4)

    source_images = jax.random.normal(k_src, (B, 3, IMG, IMG), F32)   # NCHW
    au_diffs = jax.random.normal(k_au, (B, AU_DIM), F32)
    noise = jax.random.normal(k_noise, (B, NTOK, LAT_C), F32)
    params = init_params(k_params)

    out = au_pix2pix_pipeline(source_images, au_diffs, noise, params)
    out = jax.block_until_ready(out)
    assert out.shape == (IMG, IMG, 3)
    assert bool(jnp.all(jnp.isfinite(out)))
    print("KERNEL_OK")
</pallas_src>

<mosaic_0001>
module attributes {stable_mosaic.version = 11 : i64} {
  func.func @_denoise_kernel(%arg0: i32, %arg1: memref<50xf32, #tpu.memory_space<smem>>, %arg2: memref<1x4x64xf32, #tpu.memory_space<vmem>>, %arg3: memref<1x4x64xf32, #tpu.memory_space<vmem>>, %arg4: memref<1x32x8xf32, #tpu.memory_space<vmem>>, %arg5: memref<32x50xf32, #tpu.memory_space<vmem>>, %arg6: memref<32x4xf32, #tpu.memory_space<vmem>>, %arg7: memref<32x4xf32, #tpu.memory_space<vmem>>, %arg8: memref<32x1xf32, #tpu.memory_space<vmem>>, %arg9: memref<32x32xf32, #tpu.memory_space<vmem>>, %arg10: memref<32x32xf32, #tpu.memory_space<vmem>>, %arg11: memref<32x32xf32, #tpu.memory_space<vmem>>, %arg12: memref<32x32xf32, #tpu.memory_space<vmem>>, %arg13: memref<64x32xf32, #tpu.memory_space<vmem>>, %arg14: memref<64x1xf32, #tpu.memory_space<vmem>>, %arg15: memref<32x64xf32, #tpu.memory_space<vmem>>, %arg16: memref<32x1xf32, #tpu.memory_space<vmem>>, %arg17: memref<4x32xf32, #tpu.memory_space<vmem>>, %arg18: memref<4x1xf32, #tpu.memory_space<vmem>>, %arg19: memref<1x4x64xf32, #tpu.memory_space<vmem>>) attributes {dimension_semantics = [#tpu.dimension_semantics<parallel>], iteration_bounds = array<i64: 2>, scalar_prefetch = 0 : i64, scratch_operands = 0 : i64, tpu.core_type = #tpu.core_type<tc>, window_params = [{transform_indices = @transform_0, window_bounds = array<i64: 50>}, {transform_indices = @transform_1, window_bounds = array<i64: 1, 4, 64>}, {transform_indices = @transform_2, window_bounds = array<i64: 1, 4, 64>}, {transform_indices = @transform_3, window_bounds = array<i64: 1, 32, 8>}, {pipeline_mode = #tpu.pipeline_mode<synchronous>, transform_indices = @transform_4, window_bounds = array<i64: 32, 50>}, {pipeline_mode = #tpu.pipeline_mode<synchronous>, transform_indices = @transform_5, window_bounds = array<i64: 32, 4>}, {pipeline_mode = #tpu.pipeline_mode<synchronous>, transform_indices = @transform_6, window_bounds = array<i64: 32, 4>}, {pipeline_mode = #tpu.pipeline_mode<synchronous>, transform_indices = @transform_7, window_bounds = array<i64: 32, 1>}, {pipeline_mode = #tpu.pipeline_mode<synchronous>, transform_indices = @transform_8, window_bounds = array<i64: 32, 32>}, {pipeline_mode = #tpu.pipeline_mode<synchronous>, transform_indices = @transform_9, window_bounds = array<i64: 32, 32>}, {pipeline_mode = #tpu.pipeline_mode<synchronous>, transform_indices = @transform_10, window_bounds = array<i64: 32, 32>}, {pipeline_mode = #tpu.pipeline_mode<synchronous>, transform_indices = @transform_11, window_bounds = array<i64: 32, 32>}, {pipeline_mode = #tpu.pipeline_mode<synchronous>, transform_indices = @transform_12, window_bounds = array<i64: 64, 32>}, {pipeline_mode = #tpu.pipeline_mode<synchronous>, transform_indices = @transform_13, window_bounds = array<i64: 64, 1>}, {pipeline_mode = #tpu.pipeline_mode<synchronous>, transform_indices = @transform_14, window_bounds = array<i64: 32, 64>}, {pipeline_mode = #tpu.pipeline_mode<synchronous>, transform_indices = @transform_15, window_bounds = array<i64: 32, 1>}, {pipeline_mode = #tpu.pipeline_mode<synchronous>, transform_indices = @transform_16, window_bounds = array<i64: 4, 32>}, {pipeline_mode = #tpu.pipeline_mode<synchronous>, transform_indices = @transform_17, window_bounds = array<i64: 4, 1>}, {transform_indices = @transform_18, window_bounds = array<i64: 1, 4, 64>}]} {
    %c0 = arith.constant 0 : index
    %c0_0 = arith.constant 0 : index
    %c0_1 = arith.constant 0 : index
    %0 = vector.load %arg3[%c0, %c0_0, %c0_1] : memref<1x4x64xf32, #tpu.memory_space<vmem>>, vector<1x4x64xf32>
    %1 = vector.shape_cast %0 : vector<1x4x64xf32> to vector<4x64xf32>
    %c0_2 = arith.constant 0 : index
    %c0_3 = arith.constant 0 : index
    %c0_4 = arith.constant 0 : index
    %2 = vector.load %arg4[%c0_2, %c0_3, %c0_4] : memref<1x32x8xf32, #tpu.memory_space<vmem>>, vector<1x32x8xf32>
    %3 = vector.shape_cast %2 : vector<1x32x8xf32> to vector<32x8xf32>
    %c0_5 = arith.constant 0 : index
    %c0_6 = arith.constant 0 : index
    %4 = vector.load %arg5[%c0_5, %c0_6] : memref<32x50xf32, #tpu.memory_space<vmem>>, vector<32x50xf32>
    %c0_7 = arith.constant 0 : index
    %c0_8 = arith.constant 0 : index
    %5 = vector.load %arg10[%c0_7, %c0_8] : memref<32x32xf32, #tpu.memory_space<vmem>>, vector<32x32xf32>
    %cst = arith.constant dense<0.000000e+00> : vector<32x8xf32>
    %6 = tpu.matmul %5, %3, %cst {dimension_numbers = #tpu.dot_dimension_numbers<[1], [0], [0], [1], [0, 0, 1, 1], [], []>} : vector<32x32xf32>, vector<32x8xf32>, vector<32x8xf32> -> vector<32x8xf32>
    %c0_9 = arith.constant 0 : index
    %c0_10 = arith.constant 0 : index
    %7 = vector.load %arg11[%c0_9, %c0_10] : memref<32x32xf32, #tpu.memory_space<vmem>>, vector<32x32xf32>
    %cst_11 = arith.constant dense<0.000000e+00> : vector<32x8xf32>
    %8 = tpu.matmul %7, %3, %cst_11 {dimension_numbers = #tpu.dot_dimension_numbers<[1], [0], [0], [1], [0, 0, 1, 1], [], []>} : vector<32x32xf32>, vector<32x8xf32>, vector<32x8xf32> -> vector<32x8xf32>
    %c0_12 = arith.constant 0 : index
    %c0_13 = arith.constant 0 : index
    %9 = vector.load %arg7[%c0_12, %c0_13] : memref<32x4xf32, #tpu.memory_space<vmem>>, vector<32x4xf32>
    %cst_14 = arith.constant dense<0.000000e+00> : vector<32x64xf32>
    %10 = tpu.matmul %9, %1, %cst_14 {dimension_numbers = #tpu.dot_dimension_numbers<[1], [0], [0], [1], [0, 0, 1, 1], [], []>} : vector<32x4xf32>, vector<4x64xf32>, vector<32x64xf32> -> vector<32x64xf32>
    %c0_15 = arith.constant 0 : index
    %c0_16 = arith.constant 0 : index
    %11 = vector.load %arg8[%c0_15, %c0_16] : memref<32x1xf32, #tpu.memory_space<vmem>>, vector<32x1xf32>
    %12 = vector.broadcast %11 : vector<32x1xf32> to vector<32x64xf32>
    %13 = arith.addf %10, %12 : vector<32x64xf32>
    %c0_17 = arith.constant 0 : index
    %c0_18 = arith.constant 0 : index
    %14 = vector.load %arg6[%c0_17, %c0_18] : memref<32x4xf32, #tpu.memory_space<vmem>>, vector<32x4xf32>
    %c0_19 = arith.constant 0 : index
    %c0_20 = arith.constant 0 : index
    %15 = vector.load %arg9[%c0_19, %c0_20] : memref<32x32xf32, #tpu.memory_space<vmem>>, vector<32x32xf32>
    %c0_21 = arith.constant 0 : index
    %c0_22 = arith.constant 0 : index
    %16 = vector.load %arg12[%c0_21, %c0_22] : memref<32x32xf32, #tpu.memory_space<vmem>>, vector<32x32xf32>
    %c0_23 = arith.constant 0 : index
    %c0_24 = arith.constant 0 : index
    %17 = vector.load %arg13[%c0_23, %c0_24] : memref<64x32xf32, #tpu.memory_space<vmem>>, vector<64x32xf32>
    %c0_25 = arith.constant 0 : index
    %c0_26 = arith.constant 0 : index
    %18 = vector.load %arg14[%c0_25, %c0_26] : memref<64x1xf32, #tpu.memory_space<vmem>>, vector<64x1xf32>
    %c0_27 = arith.constant 0 : index
    %c0_28 = arith.constant 0 : index
    %19 = vector.load %arg15[%c0_27, %c0_28] : memref<32x64xf32, #tpu.memory_space<vmem>>, vector<32x64xf32>
    %c0_29 = arith.constant 0 : index
    %c0_30 = arith.constant 0 : index
    %20 = vector.load %arg16[%c0_29, %c0_30] : memref<32x1xf32, #tpu.memory_space<vmem>>, vector<32x1xf32>
    %c0_31 = arith.constant 0 : index
    %c0_32 = arith.constant 0 : index
    %21 = vector.load %arg17[%c0_31, %c0_32] : memref<4x32xf32, #tpu.memory_space<vmem>>, vector<4x32xf32>
    %c0_33 = arith.constant 0 : index
    %c0_34 = arith.constant 0 : index
    %22 = vector.load %arg18[%c0_33, %c0_34] : memref<4x1xf32, #tpu.memory_space<vmem>>, vector<4x1xf32>
    %c0_35 = arith.constant 0 : index
    %c0_36 = arith.constant 0 : index
    %c0_37 = arith.constant 0 : index
    %23 = vector.load %arg2[%c0_35, %c0_36, %c0_37] : memref<1x4x64xf32, #tpu.memory_space<vmem>>, vector<1x4x64xf32>
    %24 = vector.shape_cast %23 : vector<1x4x64xf32> to vector<4x64xf32>
    %c0_i32 = arith.constant 0 : i32
    %c50_i32 = arith.constant 50 : i32
    %25 = arith.addi %c0_i32, %c50_i32 : i32
    %c1_i32 = arith.constant 1 : i32
    %26 = scf.for %arg20 = %c0_i32 to %25 step %c1_i32 iter_args(%arg21 = %24) -> (vector<4x64xf32>)  : i32 {
      %30 = tpu.iota {dimensions = array<i32: 0>} : vector<50x1xi32>
      %31 = vector.broadcast %arg20 : i32 to vector<50x1xi32>
      %32 = arith.cmpi eq, %30, %31 : vector<50x1xi32>
      %33 = arith.extui %32 : vector<50x1xi1> to vector<50x1xi32>
      %34 = arith.sitofp %33 : vector<50x1xi32> to vector<50x1xf32>
      %cst_42 = arith.constant dense<0.000000e+00> : vector<32x1xf32>
      %35 = tpu.matmul %4, %34, %cst_42 {dimension_numbers = #tpu.dot_dimension_numbers<[1], [0], [0], [1], [0, 0, 1, 1], [], []>} : vector<32x50xf32>, vector<50x1xf32>, vector<32x1xf32> -> vector<32x1xf32>
      %cst_43 = arith.constant dense<0.000000e+00> : vector<32x64xf32>
      %36 = tpu.matmul %14, %arg21, %cst_43 {dimension_numbers = #tpu.dot_dimension_numbers<[1], [0], [0], [1], [0, 0, 1, 1], [], []>} : vector<32x4xf32>, vector<4x64xf32>, vector<32x64xf32> -> vector<32x64xf32>
      %37 = arith.addf %36, %13 : vector<32x64xf32>
      %38 = vector.broadcast %35 : vector<32x1xf32> to vector<32x64xf32>
      %39 = arith.addf %37, %38 : vector<32x64xf32>
      %cst_44 = arith.constant dense<0.000000e+00> : vector<32x64xf32>
      %40 = tpu.matmul %15, %39, %cst_44 {dimension_numbers = #tpu.dot_dimension_numbers<[1], [0], [0], [1], [0, 0, 1, 1], [], []>} : vector<32x32xf32>, vector<32x64xf32>, vector<32x64xf32> -> vector<32x64xf32>
      %cst_45 = arith.constant dense<0.000000e+00> : vector<8x64xf32>
      %41 = tpu.matmul %6, %40, %cst_45 {dimension_numbers = #tpu.dot_dimension_numbers<[0], [0], [1], [1], [0, 1, 1, 1], [], []>} : vector<32x8xf32>, vector<32x64xf32>, vector<8x64xf32> -> vector<8x64xf32>
      %cst_46 = arith.constant 0.176776692 : f32
      %42 = vector.broadcast %cst_46 : f32 to vector<8x64xf32>
      %43 = arith.mulf %41, %42 : vector<8x64xf32>
      %cst_47 = arith.constant dense<0xFF800000> : vector<64xf32>
      %44 = vector.multi_reduction <maximumf>, %43, %cst_47 [0] : vector<8x64xf32> to vector<64xf32>
      %45 = vector.shape_cast %44 : vector<64xf32> to vector<1x64xf32>
      %46 = vector.broadcast %45 : vector<1x64xf32> to vector<8x64xf32>
      %47 = arith.subf %43, %46 : vector<8x64xf32>
      %48 = math.exp %47 : vector<8x64xf32>
      %cst_48 = arith.constant dense<0.000000e+00> : vector<64xf32>
      %49 = vector.multi_reduction <add>, %48, %cst_48 [0] : vector<8x64xf32> to vector<64xf32>
      %50 = vector.shape_cast %49 : vector<64xf32> to vector<1x64xf32>
      %51 = tpu.reciprocal %50 {approx = true} : vector<1x64xf32> -> vector<1x64xf32>
      %52 = vector.broadcast %51 : vector<1x64xf32> to vector<8x64xf32>
      %53 = arith.mulf %48, %52 : vector<8x64xf32>
      %cst_49 = arith.constant dense<0.000000e+00> : vector<32x64xf32>
      %54 = tpu.matmul %8, %53, %cst_49 {dimension_numbers = #tpu.dot_dimension_numbers<[1], [0], [0], [1], [0, 0, 1, 1], [], []>} : vector<32x8xf32>, vector<8x64xf32>, vector<32x64xf32> -> vector<32x64xf32>
      %cst_50 = arith.constant dense<0.000000e+00> : vector<32x64xf32>
      %55 = tpu.matmul %16, %54, %cst_50 {dimension_numbers = #tpu.dot_dimension_numbers<[1], [0], [0], [1], [0, 0, 1, 1], [], []>} : vector<32x32xf32>, vector<32x64xf32>, vector<32x64xf32> -> vector<32x64xf32>
      %56 = arith.addf %39, %55 : vector<32x64xf32>
      %cst_51 = arith.constant dense<0.000000e+00> : vector<64x64xf32>
      %57 = tpu.matmul %17, %56, %cst_51 {dimension_numbers = #tpu.dot_dimension_numbers<[1], [0], [0], [1], [0, 0, 1, 1], [], []>} : vector<64x32xf32>, vector<32x64xf32>, vector<64x64xf32> -> vector<64x64xf32>
      %58 = vector.broadcast %18 : vector<64x1xf32> to vector<64x64xf32>
      %59 = arith.addf %57, %58 : vector<64x64xf32>
      %60 = arith.mulf %59, %59 : vector<64x64xf32>
      %61 = arith.mulf %59, %60 : vector<64x64xf32>
      %cst_52 = arith.constant 4.471500e-02 : f32
      %62 = vector.broadcast %cst_52 : f32 to vector<64x64xf32>
      %63 = arith.mulf %62, %61 : vector<64x64xf32>
      %64 = arith.addf %59, %63 : vector<64x64xf32>
      %cst_53 = arith.constant 0.797884583 : f32
      %65 = vector.broadcast %cst_53 : f32 to vector<64x64xf32>
      %66 = arith.mulf %65, %64 : vector<64x64xf32>
      %67 = math.tanh %66 : vector<64x64xf32>
      %cst_54 = arith.constant 1.000000e+00 : f32
      %68 = vector.broadcast %cst_54 : f32 to vector<64x64xf32>
      %69 = arith.addf %68, %67 : vector<64x64xf32>
      %cst_55 = arith.constant 5.000000e-01 : f32
      %70 = vector.broadcast %cst_55 : f32 to vector<64x64xf32>
      %71 = arith.mulf %70, %69 : vector<64x64xf32>
      %72 = arith.mulf %59, %71 : vector<64x64xf32>
      %cst_56 = arith.constant dense<0.000000e+00> : vector<32x64xf32>
      %73 = tpu.matmul %19, %72, %cst_56 {dimension_numbers = #tpu.dot_dimension_numbers<[1], [0], [0], [1], [0, 0, 1, 1], [], []>} : vector<32x64xf32>, vector<64x64xf32>, vector<32x64xf32> -> vector<32x64xf32>
      %74 = arith.addf %56, %73 : vector<32x64xf32>
      %75 = vector.broadcast %20 : vector<32x1xf32> to vector<32x64xf32>
      %76 = arith.addf %74, %75 : vector<32x64xf32>
      %cst_57 = arith.constant dense<0.000000e+00> : vector<4x64xf32>
      %77 = tpu.matmul %21, %76, %cst_57 {dimension_numbers = #tpu.dot_dimension_numbers<[1], [0], [0], [1], [0, 0, 1, 1], [], []>} : vector<4x32xf32>, vector<32x64xf32>, vector<4x64xf32> -> vector<4x64xf32>
      %78 = vector.broadcast %22 : vector<4x1xf32> to vector<4x64xf32>
      %79 = arith.addf %77, %78 : vector<4x64xf32>
      %80 = arith.index_cast %arg20 : i32 to index
      %81 = memref.load %arg1[%80] : memref<50xf32, #tpu.memory_space<smem>>
      %82 = vector.broadcast %81 : f32 to vector<4x64xf32>
      %83 = arith.mulf %82, %79 : vector<4x64xf32>
      %84 = arith.addf %arg21, %83 : vector<4x64xf32>
      scf.yield %84 : vector<4x64xf32>
    }
    %c50_i32_38 = arith.constant 50 : i32
    %c0_39 = arith.constant 0 : index
    %c0_40 = arith.constant 0 : index
    %c0_41 = arith.constant 0 : index
    %27 = vector.load %arg19[%c0_39, %c0_40, %c0_41] : memref<1x4x64xf32, #tpu.memory_space<vmem>>, vector<1x4x64xf32>
    %28 = vector.shape_cast %27 : vector<1x4x64xf32> to vector<4x64xf32>
    %29 = vector.shape_cast %26 : vector<4x64xf32> to vector<1x4x64xf32>
    tpu.vector_store %arg19[%c0_39, %c0_40, %c0_41], %29 {strides = array<i32>} : memref<1x4x64xf32, #tpu.memory_space<vmem>>, vector<1x4x64xf32>,
    return
  }
  func.func @transform_0(%arg0: i32) -> i32 {
    %c0_i32 = arith.constant 0 : i32
    %c0_i32_0 = arith.constant 0 : i32
    return %c0_i32 : i32
  }
  func.func @transform_1(%arg0: i32) -> (i32, i32, i32) {
    %c0_i32 = arith.constant 0 : i32
    %c0_i32_0 = arith.constant 0 : i32
    %c0_i32_1 = arith.constant 0 : i32
    return %arg0, %c0_i32, %c0_i32_0 : i32, i32, i32
  }
  func.func @transform_2(%arg0: i32) -> (i32, i32, i32) {
    %c0_i32 = arith.constant 0 : i32
    %c0_i32_0 = arith.constant 0 : i32
    %c0_i32_1 = arith.constant 0 : i32
    return %arg0, %c0_i32, %c0_i32_0 : i32, i32, i32
  }
  func.func @transform_3(%arg0: i32) -> (i32, i32, i32) {
    %c0_i32 = arith.constant 0 : i32
    %c0_i32_0 = arith.constant 0 : i32
    %c0_i32_1 = arith.constant 0 : i32
    return %arg0, %c0_i32, %c0_i32_0 : i32, i32, i32
  }
  func.func @transform_4(%arg0: i32) -> (i32, i32) {
    %c0_i32 = arith.constant 0 : i32
    %c0_i32_0 = arith.constant 0 : i32
    %c0_i32_1 = arith.constant 0 : i32
    return %c0_i32, %c0_i32_0 : i32, i32
  }
  func.func @transform_5(%arg0: i32) -> (i32, i32) {
    %c0_i32 = arith.constant 0 : i32
    %c0_i32_0 = arith.constant 0 : i32
    %c0_i32_1 = arith.constant 0 : i32
    return %c0_i32, %c0_i32_0 : i32, i32
  }
  func.func @transform_6(%arg0: i32) -> (i32, i32) {
    %c0_i32 = arith.constant 0 : i32
    %c0_i32_0 = arith.constant 0 : i32
    %c0_i32_1 = arith.constant 0 : i32
    return %c0_i32, %c0_i32_0 : i32, i32
  }
  func.func @transform_7(%arg0: i32) -> (i32, i32) {
    %c0_i32 = arith.constant 0 : i32
    %c0_i32_0 = arith.constant 0 : i32
    %c0_i32_1 = arith.constant 0 : i32
    return %c0_i32, %c0_i32_0 : i32, i32
  }
  func.func @transform_8(%arg0: i32) -> (i32, i32) {
    %c0_i32 = arith.constant 0 : i32
    %c0_i32_0 = arith.constant 0 : i32
    %c0_i32_1 = arith.constant 0 : i32
    return %c0_i32, %c0_i32_0 : i32, i32
  }
  func.func @transform_9(%arg0: i32) -> (i32, i32) {
    %c0_i32 = arith.constant 0 : i32
    %c0_i32_0 = arith.constant 0 : i32
    %c0_i32_1 = arith.constant 0 : i32
    return %c0_i32, %c0_i32_0 : i32, i32
  }
  func.func @transform_10(%arg0: i32) -> (i32, i32) {
    %c0_i32 = arith.constant 0 : i32
    %c0_i32_0 = arith.constant 0 : i32
    %c0_i32_1 = arith.constant 0 : i32
    return %c0_i32, %c0_i32_0 : i32, i32
  }
  func.func @transform_11(%arg0: i32) -> (i32, i32) {
    %c0_i32 = arith.constant 0 : i32
    %c0_i32_0 = arith.constant 0 : i32
    %c0_i32_1 = arith.constant 0 : i32
    return %c0_i32, %c0_i32_0 : i32, i32
  }
  func.func @transform_12(%arg0: i32) -> (i32, i32) {
    %c0_i32 = arith.constant 0 : i32
    %c0_i32_0 = arith.constant 0 : i32
    %c0_i32_1 = arith.constant 0 : i32
    return %c0_i32, %c0_i32_0 : i32, i32
  }
  func.func @transform_13(%arg0: i32) -> (i32, i32) {
    %c0_i32 = arith.constant 0 : i32
    %c0_i32_0 = arith.constant 0 : i32
    %c0_i32_1 = arith.constant 0 : i32
    return %c0_i32, %c0_i32_0 : i32, i32
  }
  func.func @transform_14(%arg0: i32) -> (i32, i32) {
    %c0_i32 = arith.constant 0 : i32
    %c0_i32_0 = arith.constant 0 : i32
    %c0_i32_1 = arith.constant 0 : i32
    return %c0_i32, %c0_i32_0 : i32, i32
  }
  func.func @transform_15(%arg0: i32) -> (i32, i32) {
    %c0_i32 = arith.constant 0 : i32
    %c0_i32_0 = arith.constant 0 : i32
    %c0_i32_1 = arith.constant 0 : i32
    return %c0_i32, %c0_i32_0 : i32, i32
  }
  func.func @transform_16(%arg0: i32) -> (i32, i32) {
    %c0_i32 = arith.constant 0 : i32
    %c0_i32_0 = arith.constant 0 : i32
    %c0_i32_1 = arith.constant 0 : i32
    return %c0_i32, %c0_i32_0 : i32, i32
  }
  func.func @transform_17(%arg0: i32) -> (i32, i32) {
    %c0_i32 = arith.constant 0 : i32
    %c0_i32_0 = arith.constant 0 : i32
    %c0_i32_1 = arith.constant 0 : i32
    return %c0_i32, %c0_i32_0 : i32, i32
  }
  func.func @transform_18(%arg0: i32) -> (i32, i32, i32) {
    %c0_i32 = arith.constant 0 : i32
    %c0_i32_0 = arith.constant 0 : i32
    %c0_i32_1 = arith.constant 0 : i32
    return %arg0, %c0_i32, %c0_i32_0 : i32, i32, i32
  }
}

</mosaic_0001>

<llo_original>
// kernel: squeeze.1
$region0: #{squeeze.1}
  %s0 = inlined_call_operand.vmem [shape: f32[1,8,2,8,2,3], index: 0, kind: input, shape index: {}]
  %s1 = inlined_call_operand.hbm [shape: f32[16,16,3], index: 1, kind: output, shape index: {}]
  $region1: #{squeeze.1} parent=0
    #allocation0 [shape = 'u8[24576]{0}', space=vmem, size = 0x6000, scoped, tag = 'operand span for operand 1']
    #allocation1 [shape = 's32[1]{0}', space=sflag, size = 0x4, scoped, tag = 'scoped memory for squeeze.1']
    %2 = vsyncpa [#allocation1], 0
    %v3 = vld [vmem:[%s0] ss:$8 sm:$0xf]
    %v4 = vld [vmem:[%s0] ss:$8 sm:$0xf0]
    %vm5 = vcmask 1047556
    %v6 = vsel %vm5, %v4, %v3
    %vm7 = vcmask 15360
    %8 = vst.msk [vmem:[#allocation0] sm:$0xff] %vm7, %v6
    %s9 = scalar_lea.vmem %s0, 64
    %v10 = vld [vmem:[%s9] ss:$8 sm:$0xf]
    %s11 = scalar_lea.vmem %s0, 64
    %v12 = vld [vmem:[%s11] ss:$8 sm:$0xf0]
    %vm13 = vcmask 1047556
    %v14 = vsel %vm13, %v12, %v10
    %vm15 = vcmask 15360
    %s16 = scalar_lea.vmem [#allocation0], 8
    %17 = vst.msk [vmem:[%s16] sm:$0xff] %vm15, %v14
    %s18 = scalar_lea.vmem %s0, 128
    %v19 = vld [vmem:[%s18] ss:$8 sm:$0xf]
    %s20 = scalar_lea.vmem %s0, 128
    %v21 = vld [vmem:[%s20] ss:$8 sm:$0xf0]
    %vm22 = vcmask 1047556
    %v23 = vsel %vm22, %v21, %v19
    %vm24 = vcmask 15360
    %s25 = scalar_lea.vmem [#allocation0], 16
    %26 = vst.msk [vmem:[%s25] sm:$0xff] %vm24, %v23
    %s27 = scalar_lea.vmem %s0, 192
    %v28 = vld [vmem:[%s27] ss:$8 sm:$0xf]
    %s29 = scalar_lea.vmem %s0, 192
    %v30 = vld [vmem:[%s29] ss:$8 sm:$0xf0]
    %vm31 = vcmask 1047556
    %v32 = vsel %vm31, %v30, %v28
    %vm33 = vcmask 15360
    %s34 = scalar_lea.vmem [#allocation0], 24
    %35 = vst.msk [vmem:[%s34] sm:$0xff] %vm33, %v32
    %s36 = scalar_lea.vmem %s0, 256
    %v37 = vld [vmem:[%s36] ss:$8 sm:$0xf]
    %s38 = scalar_lea.vmem %s0, 256
    %v39 = vld [vmem:[%s38] ss:$8 sm:$0xf0]
    %vm40 = vcmask 1047556
    %v41 = vsel %vm40, %v39, %v37
    %vm42 = vcmask 15360
    %s43 = scalar_lea.vmem [#allocation0], 32
    %44 = vst.msk [vmem:[%s43] sm:$0xff] %vm42, %v41
    %s45 = scalar_lea.vmem %s0, 320
    %v46 = vld [vmem:[%s45] ss:$8 sm:$0xf]
    %s47 = scalar_lea.vmem %s0, 320
    %v48 = vld [vmem:[%s47] ss:$8 sm:$0xf0]
    %vm49 = vcmask 1047556
    %v50 = vsel %vm49, %v48, %v46
    %vm51 = vcmask 15360
    %s52 = scalar_lea.vmem [#allocation0], 40
    %53 = vst.msk [vmem:[%s52] sm:$0xff] %vm51, %v50
    %s54 = scalar_lea.vmem %s0, 7
    %v55 = vld [vmem:[%s54] ss:$8 sm:$0xf]
    %s56 = scalar_lea.vmem %s0, 7
    %v57 = vld [vmem:[%s56] ss:$8 sm:$0xf0]
    %vm58 = vcmask 1047556
    %v59 = vsel %vm58, %v57, %v55
    %60 = vrot.lane.b32.xlu0 %v59, 14
    %v61 = vpop.permute.xlu0 %60
    %vm62 = vcmask 130160
    %63 = vst.msk [vmem:[#allocation0] sm:$0xff] %vm62, %v61
    %s64 = scalar_lea.vmem %s0, 263
    %v65 = vld [vmem:[%s64] ss:$8 sm:$0xf]
    %s66 = scalar_lea.vmem %s0, 263
    %v67 = vld [vmem:[%s66] ss:$8 sm:$0xf0]
    %vm68 = vcmask 1047556
    %v69 = vsel %vm68, %v67, %v65
    %70 = vrot.lane.b32.xlu0 %v69, 14
    %v71 = vpop.permute.xlu0 %70
    %vm72 = vcmask 130160
    %s73 = scalar_lea.vmem [#allocation0], 32
    %74 = vst.msk [vmem:[%s73] sm:$0xff] %vm72, %v71
    %s75 = scalar_lea.vmem %s0, 71
    %v76 = vld [vmem:[%s75] ss:$8 sm:$0xf]
    %s77 = scalar_lea.vmem %s0, 71
    %v78 = vld [vmem:[%s77] ss:$8 sm:$0xf0]
    %vm79 = vcmask 1047556
    %v80 = vsel %vm79, %v78, %v76
    %81 = vrot.lane.b32.xlu0 %v80, 14
    %v82 = vpop.permute.xlu0 %81
    %vm83 = vcmask 130160
    %s84 = scalar_lea.vmem [#allocation0], 8
    %85 = vst.msk [vmem:[%s84] sm:$0xff] %vm83, %v82
    %s86 = scalar_lea.vmem %s0, 327
    %v87 = vld [vmem:[%s86] ss:$8 sm:$0xf]
    %s88 = scalar_lea.vmem %s0, 327
    %v89 = vld [vmem:[%s88] ss:$8 sm:$0xf0]
    %vm90 = vcmask 1047556
    %v91 = vsel %vm90, %v89, %v87
    %92 = vrot.lane.b32.xlu0 %v91, 14
    %v93 = vpop.permute.xlu0 %92
    %vm94 = vcmask 130160
    %s95 = scalar_lea.vmem [#allocation0], 40
    %96 = vst.msk [vmem:[%s95] sm:$0xff] %vm94, %v93
    %s97 = scalar_lea.vmem %s0, 135
    %v98 = vld [vmem:[%s97] ss:$8 sm:$0xf]
    %s99 = scalar_lea.vmem %s0, 135
    %v100 = vld [vmem:[%s99] ss:$8 sm:$0xf0]
    %vm101 = vcmask 1047556
    %v102 = vsel %vm101, %v100, %v98
    %103 = vrot.lane.b32.xlu0 %v102, 14
    %v104 = vpop.permute.xlu0 %103
    %vm105 = vcmask 130160
    %s106 = scalar_lea.vmem [#allocation0], 16
    %107 = vst.msk [vmem:[%s106] sm:$0xff] %vm105, %v104
    %s108 = scalar_lea.vmem %s0, 199
    %v109 = vld [vmem:[%s108] ss:$8 sm:$0xf]
    %s110 = scalar_lea.vmem %s0, 199
    %v111 = vld [vmem:[%s110] ss:$8 sm:$0xf0]
    %vm112 = vcmask 1047556
    %v113 = vsel %vm112, %v111, %v109
    %114 = vrot.lane.b32.xlu0 %v113, 14
    %v115 = vpop.permute.xlu0 %114
    %vm116 = vcmask 130160
    %s117 = scalar_lea.vmem [#allocation0], 24
    %118 = vst.msk [vmem:[%s117] sm:$0xff] %vm116, %v115
    %s119 = scalar_lea.vmem %s0, 6
    %v120 = vld [vmem:[%s119] ss:$8 sm:$0xf]
    %s121 = scalar_lea.vmem %s0, 6
    %v122 = vld [vmem:[%s121] ss:$8 sm:$0xf0]
    %vm123 = vcmask 1047556
    %v124 = vsel %vm123, %v122, %v120
    %125 = vrot.lane.b32.xlu0 %v124, 12
    %v126 = vpop.permute.xlu0 %125
    %vm127 = vcmask 113760
    %128 = vst.msk [vmem:[#allocation0] sm:$0xff] %vm127, %v126
    %s129 = scalar_lea.vmem %s0, 262
    %v130 = vld [vmem:[%s129] ss:$8 sm:$0xf]
    %s131 = scalar_lea.vmem %s0, 262
    %v132 = vld [vmem:[%s131] ss:$8 sm:$0xf0]
    %vm133 = vcmask 1047556
    %v134 = vsel %vm133, %v132, %v130
    %135 = vrot.lane.b32.xlu0 %v134, 12
    %v136 = vpop.permute.xlu0 %135
    %vm137 = vcmask 113760
    %s138 = scalar_lea.vmem [#allocation0], 32
    %139 = vst.msk [vmem:[%s138] sm:$0xff] %vm137, %v136
    %s140 = scalar_lea.vmem %s0, 70
    %v141 = vld [vmem:[%s140] ss:$8 sm:$0xf]
    %s142 = scalar_lea.vmem %s0, 70
    %v143 = vld [vmem:[%s142] ss:$8 sm:$0xf0]
    %vm144 = vcmask 1047556
    %v145 = vsel %vm144, %v143, %v141
    %146 = vrot.lane.b32.xlu0 %v145, 12
    %v147 = vpop.permute.xlu0 %146
    %vm148 = vcmask 113760
    %s149 = scalar_lea.vmem [#allocation0], 8
    %150 = vst.msk [vmem:[%s149] sm:$0xff] %vm148, %v147
    %s151 = scalar_lea.vmem %s0, 326
    %v152 = vld [vmem:[%s151] ss:$8 sm:$0xf]
    %s153 = scalar_lea.vmem %s0, 326
    %v154 = vld [vmem:[%s153] ss:$8 sm:$0xf0]
    %vm155 = vcmask 1047556
    %v156 = vsel %vm155, %v154, %v152
    %157 = vrot.lane.b32.xlu0 %v156, 12
    %v158 = vpop.permute.xlu0 %157
    %vm159 = vcmask 113760
    %s160 = scalar_lea.vmem [#allocation0], 40
    %161 = vst.msk [vmem:[%s160] sm:$0xff] %vm159, %v158
    %s162 = scalar_lea.vmem %s0, 134
    %v163 = vld [vmem:[%s162] ss:$8 sm:$0xf]
    %s164 = scalar_lea.vmem %s0, 134
    %v165 = vld [vmem:[%s164] ss:$8 sm:$0xf0]
    %vm166 = vcmask 1047556
    %v167 = vsel %vm166, %v165, %v163
    %168 = vrot.lane.b32.xlu0 %v167, 12
    %v169 = vpop.permute.xlu0 %168
    %vm170 = vcmask 113760
    %s171 = scalar_lea.vmem [#allocation0], 16
    %172 = vst.msk [vmem:[%s171] sm:$0xff] %vm170, %v169
    %s173 = scalar_lea.vmem %s0, 198
    %v174 = vld [vmem:[%s173] ss:$8 sm:$0xf]
    %s175 = scalar_lea.vmem %s0, 198
    %v176 = vld [vmem:[%s175] ss:$8 sm:$0xf0]
    %vm177 = vcmask 1047556
    %v178 = vsel %vm177, %v176, %v174
    %179 = vrot.lane.b32.xlu0 %v178, 12
    %v180 = vpop.permute.xlu0 %179
    %vm181 = vcmask 113760
    %s182 = scalar_lea.vmem [#allocation0], 24
    %183 = vst.msk [vmem:[%s182] sm:$0xff] %vm181, %v180
    %s184 = scalar_lea.vmem %s0, 5
    %v185 = vld [vmem:[%s184] ss:$8 sm:$0xf]
    %s186 = scalar_lea.vmem %s0, 5
    %v187 = vld [vmem:[%s186] ss:$8 sm:$0xf0]
    %vm188 = vcmask 1047556
    %v189 = vsel %vm188, %v187, %v185
    %190 = vrot.lane.b32.xlu0 %v189, 10
    %v191 = vpop.permute.xlu0 %190
    %vm192 = vcmask 97360
    %193 = vst.msk [vmem:[#allocation0] sm:$0xff] %vm192, %v191
    %s194 = scalar_lea.vmem %s0, 261
    %v195 = vld [vmem:[%s194] ss:$8 sm:$0xf]
    %s196 = scalar_lea.vmem %s0, 261
    %v197 = vld [vmem:[%s196] ss:$8 sm:$0xf0]
    %vm198 = vcmask 1047556
    %v199 = vsel %vm198, %v197, %v195
    %200 = vrot.lane.b32.xlu0 %v199, 10
    %v201 = vpop.permute.xlu0 %200
    %vm202 = vcmask 97360
    %s203 = scalar_lea.vmem [#allocation0], 32
    %204 = vst.msk [vmem:[%s203] sm:$0xff] %vm202, %v201
    %s205 = scalar_lea.vmem %s0, 69
    %v206 = vld [vmem:[%s205] ss:$8 sm:$0xf]
    %s207 = scalar_lea.vmem %s0, 69
    %v208 = vld [vmem:[%s207] ss:$8 sm:$0xf0]
    %vm209 = vcmask 1047556
    %v210 = vsel %vm209, %v208, %v206
    %211 = vrot.lane.b32.xlu0 %v210, 10
    %v212 = vpop.permute.xlu0 %211
    %vm213 = vcmask 97360
    %s214 = scalar_lea.vmem [#allocation0], 8
    %215 = vst.msk [vmem:[%s214] sm:$0xff] %vm213, %v212
    %s216 = scalar_lea.vmem %s0, 325
    %v217 = vld [vmem:[%s216] ss:$8 sm:$0xf]
    %s218 = scalar_lea.vmem %s0, 325
    %v219 = vld [vmem:[%s218] ss:$8 sm:$0xf0]
    %vm220 = vcmask 1047556
    %v221 = vsel %vm220, %v219, %v217
    %222 = vrot.lane.b32.xlu0 %v221, 10
    %v223 = vpop.permute.xlu0 %222
    %vm224 = vcmask 97360
    %s225 = scalar_lea.vmem [#allocation0], 40
    %226 = vst.msk [vmem:[%s225] sm:$0xff] %vm224, %v223
    %s227 = scalar_lea.vmem %s0, 133
    %v228 = vld [vmem:[%s227] ss:$8 sm:$0xf]
    %s229 = scalar_lea.vmem %s0, 133
    %v230 = vld [vmem:[%s229] ss:$8 sm:$0xf0]
    %vm231 = vcmask 1047556
    %v232 = vsel %vm231, %v230, %v228
    %233 = vrot.lane.b32.xlu0 %v232, 10
    %v234 = vpop.permute.xlu0 %233
    %vm235 = vcmask 97360
    %s236 = scalar_lea.vmem [#allocation0], 16
    %237 = vst.msk [vmem:[%s236] sm:$0xff] %vm235, %v234
    %s238 = scalar_lea.vmem %s0, 197
    %v239 = vld [vmem:[%s238] ss:$8 sm:$0xf]
    %s240 = scalar_lea.vmem %s0, 197
    %v241 = vld [vmem:[%s240] ss:$8 sm:$0xf0]
    %vm242 = vcmask 1047556
    %v243 = vsel %vm242, %v241, %v239
    %244 = vrot.lane.b32.xlu0 %v243, 10
    %v245 = vpop.permute.xlu0 %244
    %vm246 = vcmask 97360
    %s247 = scalar_lea.vmem [#allocation0], 24
    %248 = vst.msk [vmem:[%s247] sm:$0xff] %vm246, %v245
    %s249 = scalar_lea.vmem %s0, 4
    %v250 = vld [vmem:[%s249] ss:$8 sm:$0xf]
    %s251 = scalar_lea.vmem %s0, 4
    %v252 = vld [vmem:[%s251] ss:$8 sm:$0xf0]
    %vm253 = vcmask 1047556
    %v254 = vsel %vm253, %v252, %v250
    %255 = vrot.lane.b32.xlu0 %v254, 8
    %v256 = vpop.permute.xlu0 %255
    %vm257 = vcmask 80960
    %258 = vst.msk [vmem:[#allocation0] sm:$0xff] %vm257, %v256
    %s259 = scalar_lea.vmem %s0, 260
    %v260 = vld [vmem:[%s259] ss:$8 sm:$0xf]
    %s261 = scalar_lea.vmem %s0, 260
    %v262 = vld [vmem:[%s261] ss:$8 sm:$0xf0]
    %vm263 = vcmask 1047556
    %v264 = vsel %vm263, %v262, %v260
    %265 = vrot.lane.b32.xlu0 %v264, 8
    %v266 = vpop.permute.xlu0 %265
    %vm267 = vcmask 80960
    %s268 = scalar_lea.vmem [#allocation0], 32
    %269 = vst.msk [vmem:[%s268] sm:$0xff] %vm267, %v266
    %s270 = scalar_lea.vmem %s0, 68
    %v271 = vld [vmem:[%s270] ss:$8 sm:$0xf]
    %s272 = scalar_lea.vmem %s0, 68
    %v273 = vld [vmem:[%s272] ss:$8 sm:$0xf0]
    %vm274 = vcmask 1047556
    %v275 = vsel %vm274, %v273, %v271
    %276 = vrot.lane.b32.xlu0 %v275, 8
    %v277 = vpop.permute.xlu0 %276
    %vm278 = vcmask 80960
    %s279 = scalar_lea.vmem [#allocation0], 8
    %280 = vst.msk [vmem:[%s279] sm:$0xff] %vm278, %v277
    %s281 = scalar_lea.vmem %s0, 324
    %v282 = vld [vmem:[%s281] ss:$8 sm:$0xf]
    %s283 = scalar_lea.vmem %s0, 324
    %v284 = vld [vmem:[%s283] ss:$8 sm:$0xf0]
    %vm285 = vcmask 1047556
    %v286 = vsel %vm285, %v284, %v282
    %287 = vrot.lane.b32.xlu0 %v286, 8
    %v288 = vpop.permute.xlu0 %287
    %vm289 = vcmask 80960
    %s290 = scalar_lea.vmem [#allocation0], 40
    %291 = vst.msk [vmem:[%s290] sm:$0xff] %vm289, %v288
    %s292 = scalar_lea.vmem %s0, 132
    %v293 = vld [vmem:[%s292] ss:$8 sm:$0xf]
    %s294 = scalar_lea.vmem %s0, 132
    %v295 = vld [vmem:[%s294] ss:$8 sm:$0xf0]
    %vm296 = vcmask 1047556
    %v297 = vsel %vm296, %v295, %v293
    %298 = vrot.lane.b32.xlu0 %v297, 8
    %v299 = vpop.permute.xlu0 %298
    %vm300 = vcmask 80960
    %s301 = scalar_lea.vmem [#allocation0], 16
    %302 = vst.msk [vmem:[%s301] sm:$0xff] %vm300, %v299
    %s303 = scalar_lea.vmem %s0, 196
    %v304 = vld [vmem:[%s303] ss:$8 sm:$0xf]
    %s305 = scalar_lea.vmem %s0, 196
    %v306 = vld [vmem:[%s305] ss:$8 sm:$0xf0]
    %vm307 = vcmask 1047556
    %v308 = vsel %vm307, %v306, %v304
    %309 = vrot.lane.b32.xlu0 %v308, 8
    %v310 = vpop.permute.xlu0 %309
    %vm311 = vcmask 80960
    %s312 = scalar_lea.vmem [#allocation0], 24
    %313 = vst.msk [vmem:[%s312] sm:$0xff] %vm311, %v310
    %s314 = scalar_lea.vmem %s0, 3
    %v315 = vld [vmem:[%s314] ss:$8 sm:$0xf]
    %s316 = scalar_lea.vmem %s0, 3
    %v317 = vld [vmem:[%s316] ss:$8 sm:$0xf0]
    %vm318 = vcmask 1047556
    %v319 = vsel %vm318, %v317, %v315
    %320 = vrot.lane.b32.xlu0 %v319, 6
    %v321 = vpop.permute.xlu0 %320
    %vm322 = vcmask 64560
    %323 = vst.msk [vmem:[#allocation0] sm:$0xff] %vm322, %v321
    %s324 = scalar_lea.vmem %s0, 259
    %v325 = vld [vmem:[%s324] ss:$8 sm:$0xf]
    %s326 = scalar_lea.vmem %s0, 259
    %v327 = vld [vmem:[%s326] ss:$8 sm:$0xf0]
    %vm328 = vcmask 1047556
    %v329 = vsel %vm328, %v327, %v325
    %330 = vrot.lane.b32.xlu0 %v329, 6
    %v331 = vpop.permute.xlu0 %330
    %vm332 = vcmask 64560
    %s333 = scalar_lea.vmem [#allocation0], 32
    %334 = vst.msk [vmem:[%s333] sm:$0xff] %vm332, %v331
    %s335 = scalar_lea.vmem %s0, 67
    %v336 = vld [vmem:[%s335] ss:$8 sm:$0xf]
    %s337 = scalar_lea.vmem %s0, 67
    %v338 = vld [vmem:[%s337] ss:$8 sm:$0xf0]
    %vm339 = vcmask 1047556
    %v340 = vsel %vm339, %v338, %v336
    %341 = vrot.lane.b32.xlu0 %v340, 6
    %v342 = vpop.permute.xlu0 %341
    %vm343 = vcmask 64560
    %s344 = scalar_lea.vmem [#allocation0], 8
    %345 = vst.msk [vmem:[%s344] sm:$0xff] %vm343, %v342
    %s346 = scalar_lea.vmem %s0, 323
    %v347 = vld [vmem:[%s346] ss:$8 sm:$0xf]
    %s348 = scalar_lea.vmem %s0, 323
    %v349 = vld [vmem:[%s348] ss:$8 sm:$0xf0]
    %vm350 = vcmask 1047556
    %v351 = vsel %vm350, %v349, %v347
    %352 = vrot.lane.b32.xlu0 %v351, 6
    %v353 = vpop.permute.xlu0 %352
    %vm354 = vcmask 64560
    %s355 = scalar_lea.vmem [#allocation0], 40
    %356 = vst.msk [vmem:[%s355] sm:$0xff] %vm354, %v353
    %s357 = scalar_lea.vmem %s0, 131
    %v358 = vld [vmem:[%s357] ss:$8 sm:$0xf]
    %s359 = scalar_lea.vmem %s0, 131
    %v360 = vld [vmem:[%s359] ss:$8 sm:$0xf0]
    %vm361 = vcmask 1047556
    %v362 = vsel %vm361, %v360, %v358
    %363 = vrot.lane.b32.xlu0 %v362, 6
    %v364 = vpop.permute.xlu0 %363
    %vm365 = vcmask 64560
    %s366 = scalar_lea.vmem [#allocation0], 16
    %367 = vst.msk [vmem:[%s366] sm:$0xff] %vm365, %v364
    %s368 = scalar_lea.vmem %s0, 195
    %v369 = vld [vmem:[%s368] ss:$8 sm:$0xf]
    %s370 = scalar_lea.vmem %s0, 195
    %v371 = vld [vmem:[%s370] ss:$8 sm:$0xf0]
    %vm372 = vcmask 1047556
    %v373 = vsel %vm372, %v371, %v369
    %374 = vrot.lane.b32.xlu0 %v373, 6
    %v375 = vpop.permute.xlu0 %374
    %vm376 = vcmask 64560
    %s377 = scalar_lea.vmem [#allocation0], 24
    %378 = vst.msk [vmem:[%s377] sm:$0xff] %vm376, %v375
    %s379 = scalar_lea.vmem %s0, 2
    %v380 = vld [vmem:[%s379] ss:$8 sm:$0xf]
    %s381 = scalar_lea.vmem %s0, 2
    %v382 = vld [vmem:[%s381] ss:$8 sm:$0xf0]
    %vm383 = vcmask 1047556
    %v384 = vsel %vm383, %v382, %v380
    %385 = vrot.lane.b32.xlu0 %v384, 4
    %v386 = vpop.permute.xlu0 %385
    %vm387 = vcmask 48160
    %388 = vst.msk [vmem:[#allocation0] sm:$0xff] %vm387, %v386
    %s389 = scalar_lea.vmem %s0, 258
    %v390 = vld [vmem:[%s389] ss:$8 sm:$0xf]
    %s391 = scalar_lea.vmem %s0, 258
    %v392 = vld [vmem:[%s391] ss:$8 sm:$0xf0]
    %vm393 = vcmask 1047556
    %v394 = vsel %vm393, %v392, %v390
    %395 = vrot.lane.b32.xlu0 %v394, 4
    %v396 = vpop.permute.xlu0 %395
    %vm397 = vcmask 48160
    %s398 = scalar_lea.vmem [#allocation0], 32
    %399 = vst.msk [vmem:[%s398] sm:$0xff] %vm397, %v396
    %s400 = scalar_lea.vmem %s0, 66
    %v401 = vld [vmem:[%s400] ss:$8 sm:$0xf]
    %s402 = scalar_lea.vmem %s0, 66
    %v403 = vld [vmem:[%s402] ss:$8 sm:$0xf0]
    %vm404 = vcmask 1047556
    %v405 = vsel %vm404, %v403, %v401
    %406 = vrot.lane.b32.xlu0 %v405, 4
    %v407 = vpop.permute.xlu0 %406
    %vm408 = vcmask 48160
    %s409 = scalar_lea.vmem [#allocation0], 8
    %410 = vst.msk [vmem:[%s409] sm:$0xff] %vm408, %v407
    %s411 = scalar_lea.vmem %s0, 322
    %v412 = vld [vmem:[%s411] ss:$8 sm:$0xf]
    %s413 = scalar_lea.vmem %s0, 322
    %v414 = vld [vmem:[%s413] ss:$8 sm:$0xf0]
    %vm415 = vcmask 1047556
    %v416 = vsel %vm415, %v414, %v412
    %417 = vrot.lane.b32.xlu0 %v416, 4
    %v418 = vpop.permute.xlu0 %417
    %vm419 = vcmask 48160
    %s420 = scalar_lea.vmem [#allocation0], 40
    %421 = vst.msk [vmem:[%s420] sm:$0xff] %vm419, %v418
    %s422 = scalar_lea.vmem %s0, 130
    %v423 = vld [vmem:[%s422] ss:$8 sm:$0xf]
    %s424 = scalar_lea.vmem %s0, 130
    %v425 = vld [vmem:[%s424] ss:$8 sm:$0xf0]
    %vm426 = vcmask 1047556
    %v427 = vsel %vm426, %v425, %v423
    %428 = vrot.lane.b32.xlu0 %v427, 4
    %v429 = vpop.permute.xlu0 %428
    %vm430 = vcmask 48160
    %s431 = scalar_lea.vmem [#allocation0], 16
    %432 = vst.msk [vmem:[%s431] sm:$0xff] %vm430, %v429
    %s433 = scalar_lea.vmem %s0, 194
    %v434 = vld [vmem:[%s433] ss:$8 sm:$0xf]
    %s435 = scalar_lea.vmem %s0, 194
    %v436 = vld [vmem:[%s435] ss:$8 sm:$0xf0]
    %vm437 = vcmask 1047556
    %v438 = vsel %vm437, %v436, %v434
    %439 = vrot.lane.b32.xlu0 %v438, 4
    %v440 = vpop.permute.xlu0 %439
    %vm441 = vcmask 48160
    %s442 = scalar_lea.vmem [#allocation0], 24
    %443 = vst.msk [vmem:[%s442] sm:$0xff] %vm441, %v440
    %s444 = scalar_lea.vmem %s0, 1
    %v445 = vld [vmem:[%s444] ss:$8 sm:$0xf]
    %s446 = scalar_lea.vmem %s0, 1
    %v447 = vld [vmem:[%s446] ss:$8 sm:$0xf0]
    %vm448 = vcmask 1047556
    %v449 = vsel %vm448, %v447, %v445
    %450 = vrot.lane.b32.xlu0 %v449, 2
    %v451 = vpop.permute.xlu0 %450
    %vm452 = vcmask 31760
    %453 = vst.msk [vmem:[#allocation0] sm:$0xff] %vm452, %v451
    %s454 = scalar_lea.vmem %s0, 257
    %v455 = vld [vmem:[%s454] ss:$8 sm:$0xf]
    %s456 = scalar_lea.vmem %s0, 257
    %v457 = vld [vmem:[%s456] ss:$8 sm:$0xf0]
    %vm458 = vcmask 1047556
    %v459 = vsel %vm458, %v457, %v455
    %460 = vrot.lane.b32.xlu0 %v459, 2
    %v461 = vpop.permute.xlu0 %460
    %vm462 = vcmask 31760
    %s463 = scalar_lea.vmem [#allocation0], 32
    %464 = vst.msk [vmem:[%s463] sm:$0xff] %vm462, %v461
    %s465 = scalar_lea.vmem %s0, 65
    %v466 = vld [vmem:[%s465] ss:$8 sm:$0xf]
    %s467 = scalar_lea.vmem %s0, 65
    %v468 = vld [vmem:[%s467] ss:$8 sm:$0xf0]
    %vm469 = vcmask 1047556
    %v470 = vsel %vm469, %v468, %v466
    %471 = vrot.lane.b32.xlu0 %v470, 2
    %v472 = vpop.permute.xlu0 %471
    %vm473 = vcmask 31760
    %s474 = scalar_lea.vmem [#allocation0], 8
    %475 = vst.msk [vmem:[%s474] sm:$0xff] %vm473, %v472
    %s476 = scalar_lea.vmem %s0, 321
    %v477 = vld [vmem:[%s476] ss:$8 sm:$0xf]
    %s478 = scalar_lea.vmem %s0, 321
    %v479 = vld [vmem:[%s478] ss:$8 sm:$0xf0]
    %vm480 = vcmask 1047556
    %v481 = vsel %vm480, %v479, %v477
    %482 = vrot.lane.b32.xlu0 %v481, 2
    %v483 = vpop.permute.xlu0 %482
    %vm484 = vcmask 31760
    %s485 = scalar_lea.vmem [#allocation0], 40
    %486 = vst.msk [vmem:[%s485] sm:$0xff] %vm484, %v483
    %s487 = scalar_lea.vmem %s0, 129
    %v488 = vld [vmem:[%s487] ss:$8 sm:$0xf]
    %s489 = scalar_lea.vmem %s0, 129
    %v490 = vld [vmem:[%s489] ss:$8 sm:$0xf0]
    %vm491 = vcmask 1047556
    %v492 = vsel %vm491, %v490, %v488
    %493 = vrot.lane.b32.xlu0 %v492, 2
    %v494 = vpop.permute.xlu0 %493
    %vm495 = vcmask 31760
    %s496 = scalar_lea.vmem [#allocation0], 16
    %497 = vst.msk [vmem:[%s496] sm:$0xff] %vm495, %v494
    %s498 = scalar_lea.vmem %s0, 193
    %v499 = vld [vmem:[%s498] ss:$8 sm:$0xf]
    %s500 = scalar_lea.vmem %s0, 193
    %v501 = vld [vmem:[%s500] ss:$8 sm:$0xf0]
    %vm502 = vcmask 1047556
    %v503 = vsel %vm502, %v501, %v499
    %504 = vrot.lane.b32.xlu0 %v503, 2
    %v505 = vpop.permute.xlu0 %504
    %vm506 = vcmask 31760
    %s507 = scalar_lea.vmem [#allocation0], 24
    %508 = vst.msk [vmem:[%s507] sm:$0xff] %vm506, %v505
    %510 = vsyncadd [#allocation1], 0
    %s512 = sshll.u32 [#allocation0], 4
    %s513 = int_to_ptr.vmem [resolvable:$true] %s512
    %s514 = sshll.u32 %s1, 4
    %s515 = int_to_ptr.hbm [resolvable:$true] %s514
    %517 = dma.vmem_to_hbm [thread:$0]  %s513, 768, %s515, [#allocation1]
    %519 = dma.done [#allocation1], 768
    %520 = vsyncpa [#allocation1], 1

// kernel: au_pix2pix_pipeline.1
$region0: #{au_pix2pix_pipeline.1}
  #allocation0 [shape = 'u32[]', space=smem, size = 0x4, offset = 0x4, fixed_abs, tag = 'smem constant byte address 0x4 - core index']
  #allocation1 [shape = 'u32[72,128]{1,0:T(1,128)}', space=vmem, size = 0x9000, scoped, tag = 'internal scratch']
  %s0 = inlined_call_operand.vmem [shape: f32[50], index: 0, kind: input, shape index: {}]
  %s1 = inlined_call_operand.vmem [shape: f32[2,4,64], index: 1, kind: input, shape index: {}]
  %s2 = inlined_call_operand.vmem [shape: f32[2,4,64], index: 2, kind: input, shape index: {}]
  %s3 = inlined_call_operand.vmem [shape: f32[2,32,8], index: 3, kind: input, shape index: {}]
  %s4 = inlined_call_operand.vmem [shape: f32[32,50], index: 4, kind: input, shape index: {}]
  %s5 = inlined_call_operand.vmem [shape: f32[32,4], index: 5, kind: input, shape index: {}]
  %s6 = inlined_call_operand.vmem [shape: f32[32,4], index: 6, kind: input, shape index: {}]
  %s7 = inlined_call_operand.vmem [shape: f32[32,1], index: 7, kind: input, shape index: {}]
  %s8 = inlined_call_operand.vmem [shape: f32[32,32], index: 8, kind: input, shape index: {}]
  %s9 = inlined_call_operand.vmem [shape: f32[32,32], index: 9, kind: input, shape index: {}]
  %s10 = inlined_call_operand.vmem [shape: f32[32,32], index: 10, kind: input, shape index: {}]
  %s11 = inlined_call_operand.vmem [shape: f32[32,32], index: 11, kind: input, shape index: {}]
  %s12 = inlined_call_operand.vmem [shape: f32[64,32], index: 12, kind: input, shape index: {}]
  %s13 = inlined_call_operand.vmem [shape: f32[64,1], index: 13, kind: input, shape index: {}]
  %s14 = inlined_call_operand.vmem [shape: f32[32,64], index: 14, kind: input, shape index: {}]
  %s15 = inlined_call_operand.vmem [shape: f32[32,1], index: 15, kind: input, shape index: {}]
  %s16 = inlined_call_operand.vmem [shape: f32[4,32], index: 16, kind: input, shape index: {}]
  %s17 = inlined_call_operand.vmem [shape: f32[4,1], index: 17, kind: input, shape index: {}]
  %s18 = inlined_call_operand.vmem [shape: f32[2,4,64], index: 18, kind: output, shape index: {}]
  %s19 = sld [smem:[#allocation0]]
  $region116: #{au_pix2pix_pipeline.1} parent=0
    _
  %s21 = ssub.s32 1, %s19
  %s22 = scalar_select 0, %s21, %s19
  $region1: #{au_pix2pix_pipeline.1} parent=0
    #allocation2 [shape = 'u8[512]{0}', space=smem, size = 0x200, scoped, tag = 'input window, operand 0, single buffered']
    #allocation3 [shape = 's32[2]{0}', space=sflag, size = 0x8, scoped, tag = 'scoped memory for au_pix2pix_pipeline.1']
    %23 = vsyncpa [#allocation3], 0
    loop: start=0, step=1, limit=4
    $region2: #{au_pix2pix_pipeline.1} parent=1 // loop_pre_header
      _
    $region3: #{au_pix2pix_pipeline.1} parent=1 // loop_header
      %s25 = sphi 0, %s29
      %p26 = scmp.ge.s32.totalorder %s25, 4
      %s33 = sphi 0, %s33
      %s35 = sphi 0, %s33
      %s36 = sphi 0, %s35
      %s50 = sphi 0, %s36
      %s56 = sphi 0, %s58
      %s59 = sphi 0, %s56
      %s60 = sphi 0, %s59
      %s76 = sphi 0, %s60
      %s82 = sphi 0, %s84
      %s85 = sphi 0, %s82
      %s86 = sphi 0, %s85
      %s102 = sphi 0, %s86
      %s108 = sphi 0, %s110
      %s111 = sphi 0, %s108
      %s112 = sphi 0, %s111
      %s128 = sphi 0, %s112
      %s132 = sphi 0, %s132
      %s134 = sphi 0, %s132
      %s135 = sphi 0, %s134
      %s149 = sphi 0, %s135
      %s153 = sphi 0, %s153
      %s155 = sphi 0, %s153
      %s156 = sphi 0, %s155
      %s170 = sphi 0, %s156
      %s174 = sphi 0, %s174
      %s176 = sphi 0, %s174
      %s177 = sphi 0, %s176
      %s191 = sphi 0, %s177
      %s195 = sphi 0, %s195
      %s197 = sphi 0, %s195
      %s198 = sphi 0, %s197
      %s212 = sphi 0, %s198
      %s216 = sphi 0, %s216
      %s218 = sphi 0, %s216
      %s219 = sphi 0, %s218
      %s233 = sphi 0, %s219
      %s237 = sphi 0, %s237
      %s239 = sphi 0, %s237
      %s240 = sphi 0, %s239
      %s254 = sphi 0, %s240
      %s258 = sphi 0, %s258
      %s260 = sphi 0, %s258
      %s261 = sphi 0, %s260
      %s275 = sphi 0, %s261
      %s279 = sphi 0, %s279
      %s281 = sphi 0, %s279
      %s282 = sphi 0, %s281
      %s296 = sphi 0, %s282
      %s300 = sphi 0, %s300
      %s302 = sphi 0, %s300
      %s303 = sphi 0, %s302
      %s317 = sphi 0, %s303
      %s321 = sphi 0, %s321
      %s323 = sphi 0, %s321
      %s324 = sphi 0, %s323
      %s338 = sphi 0, %s324
      %s342 = sphi 0, %s342
      %s344 = sphi 0, %s342
      %s345 = sphi 0, %s344
      %s359 = sphi 0, %s345
      %s363 = sphi 0, %s363
      %s365 = sphi 0, %s363
      %s366 = sphi 0, %s365
      %s380 = sphi 0, %s366
      %s384 = sphi 0, %s384
      %s386 = sphi 0, %s384
      %s387 = sphi 0, %s386
      %s401 = sphi 0, %s387
      %s405 = sphi 0, %s405
      %s407 = sphi 0, %s405
      %s408 = sphi 0, %s407
      %s422 = sphi 0, %s408
      %s428 = sphi 0, %s430
      %s431 = sphi 0, %s428
      %s432 = sphi 0, %s431
      %s448 = sphi 0, %s432
    $region4: #{au_pix2pix_pipeline.1} parent=1 // loop_header_branch
      %28 = sbr.rel (%p26) target = $region8
    $region5: #{au_pix2pix_pipeline.1} parent=1 // loop_body
      %s30 = ssub.s32 %s25, 1
      %s31 = ssub.s32 %s25, 2
      %s32 = sadd.s32 %s25, 1
      %s34 = sadd.s32 %s33, 1
      %p37 = scmp.eq.s32.totalorder %s25, 1
      %p38 = scmp.ne.s32.totalorder %s33, %s35
      %p39 = scmp.eq.s32.totalorder %s25, 0
      %p40 = por %p38, %p39
      %p41 = scmp.ne.s32.totalorder %s33, %s35
      %p42 = scmp.eq.s32.totalorder %s30, 1
      %p43 = por %p41, %p42
      %p44 = scmp.ne.s32.totalorder %s35, %s36
      %p45 = scmp.eq.s32.totalorder %s30, 0
      %p46 = por %p44, %p45
      %p47 = scmp.ne.s32.totalorder %s35, %s36
      %p48 = scmp.eq.s32.totalorder %s31, 1
      %p49 = por %p47, %p48
      %p51 = scmp.ne.s32.totalorder %s36, %s50
      %p52 = scmp.eq.s32.totalorder %s31, 0
      %p53 = por %p51, %p52
      %s54 = ssub.s32 %s25, %s32
      %p55 = scmp.eq.s32.totalorder %s54, 0
      %s57 = sadd.s32 %s56, 1
      %s58 = scalar_select %p55, %s56, %s57
      %p61 = pneg %p55
      %p62 = scmp.eq.s32.totalorder %s25, 1
      %p63 = por %p61, %p62
      %p64 = scmp.ne.s32.totalorder %s56, %s59
      %p65 = scmp.eq.s32.totalorder %s25, 0
      %p66 = por %p64, %p65
      %p67 = scmp.ne.s32.totalorder %s56, %s59
      %p68 = scmp.eq.s32.totalorder %s30, 1
      %p69 = por %p67, %p68
      %p70 = scmp.ne.s32.totalorder %s59, %s60
      %p71 = scmp.eq.s32.totalorder %s30, 0
      %p72 = por %p70, %p71
      %p73 = scmp.ne.s32.totalorder %s59, %s60
      %p74 = scmp.eq.s32.totalorder %s31, 1
      %p75 = por %p73, %p74
      %p77 = scmp.ne.s32.totalorder %s60, %s76
      %p78 = scmp.eq.s32.totalorder %s31, 0
      %p79 = por %p77, %p78
      %s80 = ssub.s32 %s25, %s32
      %p81 = scmp.eq.s32.totalorder %s80, 0
      %s83 = sadd.s32 %s82, 1
      %s84 = scalar_select %p81, %s82, %s83
      %p87 = pneg %p81
      %p88 = scmp.eq.s32.totalorder %s25, 1
      %p89 = por %p87, %p88
      %p90 = scmp.ne.s32.totalorder %s82, %s85
      %p91 = scmp.eq.s32.totalorder %s25, 0
      %p92 = por %p90, %p91
      %p93 = scmp.ne.s32.totalorder %s82, %s85
      %p94 = scmp.eq.s32.totalorder %s30, 1
      %p95 = por %p93, %p94
      %p96 = scmp.ne.s32.totalorder %s85, %s86
      %p97 = scmp.eq.s32.totalorder %s30, 0
      %p98 = por %p96, %p97
      %p99 = scmp.ne.s32.totalorder %s85, %s86
      %p100 = scmp.eq.s32.totalorder %s31, 1
      %p101 = por %p99, %p100
      %p103 = scmp.ne.s32.totalorder %s86, %s102
      %p104 = scmp.eq.s32.totalorder %s31, 0
      %p105 = por %p103, %p104
      %s106 = ssub.s32 %s25, %s32
      %p107 = scmp.eq.s32.totalorder %s106, 0
      %s109 = sadd.s32 %s108, 1
      %s110 = scalar_select %p107, %s108, %s109
      %p113 = pneg %p107
      %p114 = scmp.eq.s32.totalorder %s25, 1
      %p115 = por %p113, %p114
      %p116 = scmp.ne.s32.totalorder %s108, %s111
      %p117 = scmp.eq.s32.totalorder %s25, 0
      %p118 = por %p116, %p117
      %p119 = scmp.ne.s32.totalorder %s108, %s111
      %p120 = scmp.eq.s32.totalorder %s30, 1
      %p121 = por %p119, %p120
      %p122 = scmp.ne.s32.totalorder %s111, %s112
      %p123 = scmp.eq.s32.totalorder %s30, 0
      %p124 = por %p122, %p123
      %p125 = scmp.ne.s32.totalorder %s111, %s112
      %p126 = scmp.eq.s32.totalorder %s31, 1
      %p127 = por %p125, %p126
      %p129 = scmp.ne.s32.totalorder %s112, %s128
      %p130 = scmp.eq.s32.totalorder %s31, 0
      %p131 = por %p129, %p130
      %s133 = sadd.s32 %s132, 1
      %p136 = scmp.eq.s32.totalorder %s25, 1
      %p137 = scmp.ne.s32.totalorder %s132, %s134
      %p138 = scmp.eq.s32.totalorder %s25, 0
      %p139 = por %p137, %p138
      %p140 = scmp.ne.s32.totalorder %s132, %s134
      %p141 = scmp.eq.s32.totalorder %s30, 1
      %p142 = por %p140, %p141
      %p143 = scmp.ne.s32.totalorder %s134, %s135
      %p144 = scmp.eq.s32.totalorder %s30, 0
      %p145 = por %p143, %p144
      %p146 = scmp.ne.s32.totalorder %s134, %s135
      %p147 = scmp.eq.s32.totalorder %s31, 1
      %p148 = por %p146, %p147
      %p150 = scmp.ne.s32.totalorder %s135, %s149
      %p151 = scmp.eq.s32.totalorder %s31, 0
      %p152 = por %p150, %p151
      %s154 = sadd.s32 %s153, 1
      %p157 = scmp.eq.s32.totalorder %s25, 1
      %p158 = scmp.ne.s32.totalorder %s153, %s155
      %p159 = scmp.eq.s32.totalorder %s25, 0
      %p160 = por %p158, %p159
      %p161 = scmp.ne.s32.totalorder %s153, %s155
      %p162 = scmp.eq.s32.totalorder %s30, 1
      %p163 = por %p161, %p162
      %p164 = scmp.ne.s32.totalorder %s155, %s156
      %p165 = scmp.eq.s32.totalorder %s30, 0
      %p166 = por %p164, %p165
      %p167 = scmp.ne.s32.totalorder %s155, %s156
      %p168 = scmp.eq.s32.totalorder %s31, 1
      %p169 = por %p167, %p168
      %p171 = scmp.ne.s32.totalorder %s156, %s170
      %p172 = scmp.eq.s32.totalorder %s31, 0
      %p173 = por %p171, %p172
      %s175 = sadd.s32 %s174, 1
      %p178 = scmp.eq.s32.totalorder %s25, 1
      %p179 = scmp.ne.s32.totalorder %s174, %s176
      %p180 = scmp.eq.s32.totalorder %s25, 0
      %p181 = por %p179, %p180
      %p182 = scmp.ne.s32.totalorder %s174, %s176
      %p183 = scmp.eq.s32.totalorder %s30, 1
      %p184 = por %p182, %p183
      %p185 = scmp.ne.s32.totalorder %s176, %s177
      %p186 = scmp.eq.s32.totalorder %s30, 0
      %p187 = por %p185, %p186
      %p188 = scmp.ne.s32.totalorder %s176, %s177
      %p189 = scmp.eq.s32.totalorder %s31, 1
      %p190 = por %p188, %p189
      %p192 = scmp.ne.s32.totalorder %s177, %s191
      %p193 = scmp.eq.s32.totalorder %s31, 0
      %p194 = por %p192, %p193
      %s196 = sadd.s32 %s195, 1
      %p199 = scmp.eq.s32.totalorder %s25, 1
      %p200 = scmp.ne.s32.totalorder %s195, %s197
      %p201 = scmp.eq.s32.totalorder %s25, 0
      %p202 = por %p200, %p201
      %p203 = scmp.ne.s32.totalorder %s195, %s197
      %p204 = scmp.eq.s32.totalorder %s30, 1
      %p205 = por %p203, %p204
      %p206 = scmp.ne.s32.totalorder %s197, %s198
      %p207 = scmp.eq.s32.totalorder %s30, 0
      %p208 = por %p206, %p207
      %p209 = scmp.ne.s32.totalorder %s197, %s198
      %p210 = scmp.eq.s32.totalorder %s31, 1
      %p211 = por %p209, %p210
      %p213 = scmp.ne.s32.totalorder %s198, %s212
      %p214 = scmp.eq.s32.totalorder %s31, 0
      %p215 = por %p213, %p214
      %s217 = sadd.s32 %s216, 1
      %p220 = scmp.eq.s32.totalorder %s25, 1
      %p221 = scmp.ne.s32.totalorder %s216, %s218
      %p222 = scmp.eq.s32.totalorder %s25, 0
      %p223 = por %p221, %p222
      %p224 = scmp.ne.s32.totalorder %s216, %s218
      %p225 = scmp.eq.s32.totalorder %s30, 1
      %p226 = por %p224, %p225
      %p227 = scmp.ne.s32.totalorder %s218, %s219
      %p228 = scmp.eq.s32.totalorder %s30, 0
      %p229 = por %p227, %p228
      %p230 = scmp.ne.s32.totalorder %s218, %s219
      %p231 = scmp.eq.s32.totalorder %s31, 1
      %p232 = por %p230, %p231
      %p234 = scmp.ne.s32.totalorder %s219, %s233
      %p235 = scmp.eq.s32.totalorder %s31, 0
      %p236 = por %p234, %p235
      %s238 = sadd.s32 %s237, 1
      %p241 = scmp.eq.s32.totalorder %s25, 1
      %p242 = scmp.ne.s32.totalorder %s237, %s239
      %p243 = scmp.eq.s32.totalorder %s25, 0
      %p244 = por %p242, %p243
      %p245 = scmp.ne.s32.totalorder %s237, %s239
      %p246 = scmp.eq.s32.totalorder %s30, 1
      %p247 = por %p245, %p246
      %p248 = scmp.ne.s32.totalorder %s239, %s240
      %p249 = scmp.eq.s32.totalorder %s30, 0
      %p250 = por %p248, %p249
      %p251 = scmp.ne.s32.totalorder %s239, %s240
      %p252 = scmp.eq.s32.totalorder %s31, 1
      %p253 = por %p251, %p252
      %p255 = scmp.ne.s32.totalorder %s240, %s254
      %p256 = scmp.eq.s32.totalorder %s31, 0
      %p257 = por %p255, %p256
      %s259 = sadd.s32 %s258, 1
      %p262 = scmp.eq.s32.totalorder %s25, 1
      %p263 = scmp.ne.s32.totalorder %s258, %s260
      %p264 = scmp.eq.s32.totalorder %s25, 0
      %p265 = por %p263, %p264
      %p266 = scmp.ne.s32.totalorder %s258, %s260
      %p267 = scmp.eq.s32.totalorder %s30, 1
      %p268 = por %p266, %p267
      %p269 = scmp.ne.s32.totalorder %s260, %s261
      %p270 = scmp.eq.s32.totalorder %s30, 0
      %p271 = por %p269, %p270
      %p272 = scmp.ne.s32.totalorder %s260, %s261
      %p273 = scmp.eq.s32.totalorder %s31, 1
      %p274 = por %p272, %p273
      %p276 = scmp.ne.s32.totalorder %s261, %s275
      %p277 = scmp.eq.s32.totalorder %s31, 0
      %p278 = por %p276, %p277
      %s280 = sadd.s32 %s279, 1
      %p283 = scmp.eq.s32.totalorder %s25, 1
      %p284 = scmp.ne.s32.totalorder %s279, %s281
      %p285 = scmp.eq.s32.totalorder %s25, 0
      %p286 = por %p284, %p285
      %p287 = scmp.ne.s32.totalorder %s279, %s281
      %p288 = scmp.eq.s32.totalorder %s30, 1
      %p289 = por %p287, %p288
      %p290 = scmp.ne.s32.totalorder %s281, %s282
      %p291 = scmp.eq.s32.totalorder %s30, 0
      %p292 = por %p290, %p291
      %p293 = scmp.ne.s32.totalorder %s281, %s282
      %p294 = scmp.eq.s32.totalorder %s31, 1
      %p295 = por %p293, %p294
      %p297 = scmp.ne.s32.totalorder %s282, %s296
      %p298 = scmp.eq.s32.totalorder %s31, 0
      %p299 = por %p297, %p298
      %s301 = sadd.s32 %s300, 1
      %p304 = scmp.eq.s32.totalorder %s25, 1
      %p305 = scmp.ne.s32.totalorder %s300, %s302
      %p306 = scmp.eq.s32.totalorder %s25, 0
      %p307 = por %p305, %p306
      %p308 = scmp.ne.s32.totalorder %s300, %s302
      %p309 = scmp.eq.s32.totalorder %s30, 1
      %p310 = por %p308, %p309
      %p311 = scmp.ne.s32.totalorder %s302, %s303
      %p312 = scmp.eq.s32.totalorder %s30, 0
      %p313 = por %p311, %p312
      %p314 = scmp.ne.s32.totalorder %s302, %s303
      %p315 = scmp.eq.s32.totalorder %s31, 1
      %p316 = por %p314, %p315
      %p318 = scmp.ne.s32.totalorder %s303, %s317
      %p319 = scmp.eq.s32.totalorder %s31, 0
      %p320 = por %p318, %p319
      %s322 = sadd.s32 %s321, 1
      %p325 = scmp.eq.s32.totalorder %s25, 1
      %p326 = scmp.ne.s32.totalorder %s321, %s323
      %p327 = scmp.eq.s32.totalorder %s25, 0
      %p328 = por %p326, %p327
      %p329 = scmp.ne.s32.totalorder %s321, %s323
      %p330 = scmp.eq.s32.totalorder %s30, 1
      %p331 = por %p329, %p330
      %p332 = scmp.ne.s32.totalorder %s323, %s324
      %p333 = scmp.eq.s32.totalorder %s30, 0
      %p334 = por %p332, %p333
      %p335 = scmp.ne.s32.totalorder %s323, %s324
      %p336 = scmp.eq.s32.totalorder %s31, 1
      %p337 = por %p335, %p336
      %p339 = scmp.ne.s32.totalorder %s324, %s338
      %p340 = scmp.eq.s32.totalorder %s31, 0
      %p341 = por %p339, %p340
      %s343 = sadd.s32 %s342, 1
      %p346 = scmp.eq.s32.totalorder %s25, 1
      %p347 = scmp.ne.s32.totalorder %s342, %s344
      %p348 = scmp.eq.s32.totalorder %s25, 0
      %p349 = por %p347, %p348
      %p350 = scmp.ne.s32.totalorder %s342, %s344
      %p351 = scmp.eq.s32.totalorder %s30, 1
      %p352 = por %p350, %p351
      %p353 = scmp.ne.s32.totalorder %s344, %s345
      %p354 = scmp.eq.s32.totalorder %s30, 0
      %p355 = por %p353, %p354
      %p356 = scmp.ne.s32.totalorder %s344, %s345
      %p357 = scmp.eq.s32.totalorder %s31, 1
      %p358 = por %p356, %p357
      %p360 = scmp.ne.s32.totalorder %s345, %s359
      %p361 = scmp.eq.s32.totalorder %s31, 0
      %p362 = por %p360, %p361
      %s364 = sadd.s32 %s363, 1
      %p367 = scmp.eq.s32.totalorder %s25, 1
      %p368 = scmp.ne.s32.totalorder %s363, %s365
      %p369 = scmp.eq.s32.totalorder %s25, 0
      %p370 = por %p368, %p369
      %p371 = scmp.ne.s32.totalorder %s363, %s365
      %p372 = scmp.eq.s32.totalorder %s30, 1
      %p373 = por %p371, %p372
      %p374 = scmp.ne.s32.totalorder %s365, %s366
      %p375 = scmp.eq.s32.totalorder %s30, 0
      %p376 = por %p374, %p375
      %p377 = scmp.ne.s32.totalorder %s365, %s366
      %p378 = scmp.eq.s32.totalorder %s31, 1
      %p379 = por %p377, %p378
      %p381 = scmp.ne.s32.totalorder %s366, %s380
      %p382 = scmp.eq.s32.totalorder %s31, 0
      %p383 = por %p381, %p382
      %s385 = sadd.s32 %s384, 1
      %p388 = scmp.eq.s32.totalorder %s25, 1
      %p389 = scmp.ne.s32.totalorder %s384, %s386
      %p390 = scmp.eq.s32.totalorder %s25, 0
      %p391 = por %p389, %p390
      %p392 = scmp.ne.s32.totalorder %s384, %s386
      %p393 = scmp.eq.s32.totalorder %s30, 1
      %p394 = por %p392, %p393
      %p395 = scmp.ne.s32.totalorder %s386, %s387
      %p396 = scmp.eq.s32.totalorder %s30, 0
      %p397 = por %p395, %p396
      %p398 = scmp.ne.s32.totalorder %s386, %s387
      %p399 = scmp.eq.s32.totalorder %s31, 1
      %p400 = por %p398, %p399
      %p402 = scmp.ne.s32.totalorder %s387, %s401
      %p403 = scmp.eq.s32.totalorder %s31, 0
      %p404 = por %p402, %p403
      %s406 = sadd.s32 %s405, 1
      %p409 = scmp.eq.s32.totalorder %s25, 1
      %p410 = scmp.ne.s32.totalorder %s405, %s407
      %p411 = scmp.eq.s32.totalorder %s25, 0
      %p412 = por %p410, %p411
      %p413 = scmp.ne.s32.totalorder %s405, %s407
      %p414 = scmp.eq.s32.totalorder %s30, 1
      %p415 = por %p413, %p414
      %p416 = scmp.ne.s32.totalorder %s407, %s408
      %p417 = scmp.eq.s32.totalorder %s30, 0
      %p418 = por %p416, %p417
      %p419 = scmp.ne.s32.totalorder %s407, %s408
      %p420 = scmp.eq.s32.totalorder %s31, 1
      %p421 = por %p419, %p420
      %p423 = scmp.ne.s32.totalorder %s408, %s422
      %p424 = scmp.eq.s32.totalorder %s31, 0
      %p425 = por %p423, %p424
      %s426 = ssub.s32 %s25, %s32
      %p427 = scmp.eq.s32.totalorder %s426, 0
      %s429 = sadd.s32 %s428, 1
      %s430 = scalar_select %p427, %s428, %s429
      %p433 = pneg %p427
      %p434 = scmp.eq.s32.totalorder %s25, 1
      %p435 = por %p433, %p434
      %p436 = scmp.ne.s32.totalorder %s428, %s431
      %p437 = scmp.eq.s32.totalorder %s25, 0
      %p438 = por %p436, %p437
      %p439 = scmp.ne.s32.totalorder %s428, %s431
      %p440 = scmp.eq.s32.totalorder %s30, 1
      %p441 = por %p439, %p440
      %p442 = scmp.ne.s32.totalorder %s431, %s432
      %p443 = scmp.eq.s32.totalorder %s30, 0
      %p444 = por %p442, %p443
      %p445 = scmp.ne.s32.totalorder %s431, %s432
      %p446 = scmp.eq.s32.totalorder %s31, 1
      %p447 = por %p445, %p446
      %p449 = scmp.ne.s32.totalorder %s432, %s448
      %p450 = scmp.eq.s32.totalorder %s31, 0
      %p451 = por %p449, %p450
      %p452 = scmp.le.s32.totalorder 1, %s25
      %p453 = scmp.lt.s32.totalorder %s25, 3
      %p454 = pnand %p452, %p453
      %p455 = pneg %p454
      // Predicated region
      $region9: #{au_pix2pix_pipeline.1} parent=5 // pred_check
        _
      $region10: #{au_pix2pix_pipeline.1} parent=5 // pred_check_branch
        %457 = sbr.rel (%p454) target = $region12
      $region11: #{au_pix2pix_pipeline.1} parent=5 // pred_region
        %s458 = ssub.s32 %s25, 1
        // Predicated region
        $region13: #{au_pix2pix_pipeline.1} parent=11 // pred_check
          %p459 = pneg %p46
        $region14: #{au_pix2pix_pipeline.1} parent=11 // pred_check_branch
          %461 = sbr.rel (%p459) target = $region16
        $region15: #{au_pix2pix_pipeline.1} parent=11 // pred_region
          %463 = vsyncadd [#allocation3], 0
          %s465 = sshll.u32 %s0, 4
          %s466 = int_to_ptr.vmem [resolvable:$true] %s465
          %468 = dma.vmem_to_smem %s466, 16, [#allocation2], [#allocation3]
        $region16: #{au_pix2pix_pipeline.1} parent=11 // pred_fallthru
          _
        // Predicated region
        $region17: #{au_pix2pix_pipeline.1} parent=11 // pred_check
          %p469 = pneg %p145
        $region18: #{au_pix2pix_pipeline.1} parent=11 // pred_check_branch
          %471 = sbr.rel (%p469) target = $region20
        $region19: #{au_pix2pix_pipeline.1} parent=11 // pred_region
          _
        $region20: #{au_pix2pix_pipeline.1} parent=11 // pred_fallthru
          _
        // Predicated region
        $region21: #{au_pix2pix_pipeline.1} parent=11 // pred_check
          %p472 = pneg %p166
        $region22: #{au_pix2pix_pipeline.1} parent=11 // pred_check_branch
          %474 = sbr.rel (%p472) target = $region24
        $region23: #{au_pix2pix_pipeline.1} parent=11 // pred_region
          _
        $region24: #{au_pix2pix_pipeline.1} parent=11 // pred_fallthru
          _
        // Predicated region
        $region25: #{au_pix2pix_pipeline.1} parent=11 // pred_check
          %p475 = pneg %p187
        $region26: #{au_pix2pix_pipeline.1} parent=11 // pred_check_branch
          %477 = sbr.rel (%p475) target = $region28
        $region27: #{au_pix2pix_pipeline.1} parent=11 // pred_region
          _
        $region28: #{au_pix2pix_pipeline.1} parent=11 // pred_fallthru
          _
        // Predicated region
        $region29: #{au_pix2pix_pipeline.1} parent=11 // pred_check
          %p478 = pneg %p208
        $region30: #{au_pix2pix_pipeline.1} parent=11 // pred_check_branch
          %480 = sbr.rel (%p478) target = $region32
        $region31: #{au_pix2pix_pipeline.1} parent=11 // pred_region
          _
        $region32: #{au_pix2pix_pipeline.1} parent=11 // pred_fallthru
          _
        // Predicated region
        $region33: #{au_pix2pix_pipeline.1} parent=11 // pred_check
          %p481 = pneg %p229
        $region34: #{au_pix2pix_pipeline.1} parent=11 // pred_check_branch
          %483 = sbr.rel (%p481) target = $region36
        $region35: #{au_pix2pix_pipeline.1} parent=11 // pred_region
          _
        $region36: #{au_pix2pix_pipeline.1} parent=11 // pred_fallthru
          _
        // Predicated region
        $region37: #{au_pix2pix_pipeline.1} parent=11 // pred_check
          %p484 = pneg %p250
        $region38: #{au_pix2pix_pipeline.1} parent=11 // pred_check_branch
          %486 = sbr.rel (%p484) target = $region40
        $region39: #{au_pix2pix_pipeline.1} parent=11 // pred_region
          _
        $region40: #{au_pix2pix_pipeline.1} parent=11 // pred_fallthru
          _
        // Predicated region
        $region41: #{au_pix2pix_pipeline.1} parent=11 // pred_check
          %p487 = pneg %p271
        $region42: #{au_pix2pix_pipeline.1} parent=11 // pred_check_branch
          %489 = sbr.rel (%p487) target = $region44
        $region43: #{au_pix2pix_pipeline.1} parent=11 // pred_region
          _
        $region44: #{au_pix2pix_pipeline.1} parent=11 // pred_fallthru
          _
        // Predicated region
        $region45: #{au_pix2pix_pipeline.1} parent=11 // pred_check
          %p490 = pneg %p292
        $region46: #{au_pix2pix_pipeline.1} parent=11 // pred_check_branch
          %492 = sbr.rel (%p490) target = $region48
        $region47: #{au_pix2pix_pipeline.1} parent=11 // pred_region
          _
        $region48: #{au_pix2pix_pipeline.1} parent=11 // pred_fallthru
          _
        // Predicated region
        $region49: #{au_pix2pix_pipeline.1} parent=11 // pred_check
          %p493 = pneg %p313
        $region50: #{au_pix2pix_pipeline.1} parent=11 // pred_check_branch
          %495 = sbr.rel (%p493) target = $region52
        $region51: #{au_pix2pix_pipeline.1} parent=11 // pred_region
          _
        $region52: #{au_pix2pix_pipeline.1} parent=11 // pred_fallthru
          _
        // Predicated region
        $region53: #{au_pix2pix_pipeline.1} parent=11 // pred_check
          %p496 = pneg %p334
        $region54: #{au_pix2pix_pipeline.1} parent=11 // pred_check_branch
          %498 = sbr.rel (%p496) target = $region56
        $region55: #{au_pix2pix_pipeline.1} parent=11 // pred_region
          _
        $region56: #{au_pix2pix_pipeline.1} parent=11 // pred_fallthru
          _
        // Predicated region
        $region57: #{au_pix2pix_pipeline.1} parent=11 // pred_check
          %p499 = pneg %p355
        $region58: #{au_pix2pix_pipeline.1} parent=11 // pred_check_branch
          %501 = sbr.rel (%p499) target = $region60
        $region59: #{au_pix2pix_pipeline.1} parent=11 // pred_region
          _
        $region60: #{au_pix2pix_pipeline.1} parent=11 // pred_fallthru
          _
        // Predicated region
        $region61: #{au_pix2pix_pipeline.1} parent=11 // pred_check
          %p502 = pneg %p376
        $region62: #{au_pix2pix_pipeline.1} parent=11 // pred_check_branch
          %504 = sbr.rel (%p502) target = $region64
        $region63: #{au_pix2pix_pipeline.1} parent=11 // pred_region
          _
        $region64: #{au_pix2pix_pipeline.1} parent=11 // pred_fallthru
          _
        // Predicated region
        $region65: #{au_pix2pix_pipeline.1} parent=11 // pred_check
          %p505 = pneg %p397
        $region66: #{au_pix2pix_pipeline.1} parent=11 // pred_check_branch
          %507 = sbr.rel (%p505) target = $region68
        $region67: #{au_pix2pix_pipeline.1} parent=11 // pred_region
          _
        $region68: #{au_pix2pix_pipeline.1} parent=11 // pred_fallthru
          _
        // Predicated region
        $region69: #{au_pix2pix_pipeline.1} parent=11 // pred_check
          %p508 = pneg %p418
        $region70: #{au_pix2pix_pipeline.1} parent=11 // pred_check_branch
          %510 = sbr.rel (%p508) target = $region72
        $region71: #{au_pix2pix_pipeline.1} parent=11 // pred_region
          _
        $region72: #{au_pix2pix_pipeline.1} parent=11 // pred_fallthru
          _
      $region12: #{au_pix2pix_pipeline.1} parent=5 // pred_fallthru
        _
      %p511 = scmp.lt.s32.totalorder %s25, 2
      // Predicated region
      $region73: #{au_pix2pix_pipeline.1} parent=5 // pred_check
        %p512 = pneg %p511
      $region74: #{au_pix2pix_pipeline.1} parent=5 // pred_check_branch
        %514 = sbr.rel (%p512) target = $region76
      $region75: #{au_pix2pix_pipeline.1} parent=5 // pred_region
        // Predicated region
        $region77: #{au_pix2pix_pipeline.1} parent=75 // pred_check
          %p515 = pneg %p66
        $region78: #{au_pix2pix_pipeline.1} parent=75 // pred_check_branch
          %517 = sbr.rel (%p515) target = $region80
        $region79: #{au_pix2pix_pipeline.1} parent=75 // pred_region
          %p518 = scmp.lt.s32.totalorder %s25, 1
          %s519 = scalar_select %p518, %s25, 1
          %s520 = smul.addr %s519, 4
          %s521 = scalar_lea.vmem %s1, %s520
        $region80: #{au_pix2pix_pipeline.1} parent=75 // pred_fallthru
          _
        // Predicated region
        $region81: #{au_pix2pix_pipeline.1} parent=75 // pred_check
          %p522 = pneg %p92
        $region82: #{au_pix2pix_pipeline.1} parent=75 // pred_check_branch
          %524 = sbr.rel (%p522) target = $region84
        $region83: #{au_pix2pix_pipeline.1} parent=75 // pred_region
          %p525 = scmp.lt.s32.totalorder %s25, 1
          %s526 = scalar_select %p525, %s25, 1
          %s527 = smul.addr %s526, 4
          %s528 = scalar_lea.vmem %s2, %s527
        $region84: #{au_pix2pix_pipeline.1} parent=75 // pred_fallthru
          _
        // Predicated region
        $region85: #{au_pix2pix_pipeline.1} parent=75 // pred_check
          %p529 = pneg %p118
        $region86: #{au_pix2pix_pipeline.1} parent=75 // pred_check_branch
          %531 = sbr.rel (%p529) target = $region88
        $region87: #{au_pix2pix_pipeline.1} parent=75 // pred_region
          %p532 = scmp.lt.s32.totalorder %s25, 1
          %s533 = scalar_select %p532, %s25, 1
          %s534 = smul.addr %s533, 4
          %s535 = smul.addr %s534, 8
          %s536 = scalar_lea.vmem %s3, %s535
        $region88: #{au_pix2pix_pipeline.1} parent=75 // pred_fallthru
          _
      $region76: #{au_pix2pix_pipeline.1} parent=5 // pred_fallthru
        _
      %p537 = scmp.le.s32.totalorder 1, %s25
      %p538 = scmp.lt.s32.totalorder %s25, 3
      %p539 = pnand %p537, %p538
      %p540 = pneg %p539
      // Predicated region
      $region89: #{au_pix2pix_pipeline.1} parent=5 // pred_check
        _
      $region90: #{au_pix2pix_pipeline.1} parent=5 // pred_check_branch
        %542 = sbr.rel (%p539) target = $region92
      $region91: #{au_pix2pix_pipeline.1} parent=5 // pred_region
        %s543 = ssub.s32 %s25, 1
        // Predicated region
        $region93: #{au_pix2pix_pipeline.1} parent=91 // pred_check
          %p544 = pneg %p46
        $region94: #{au_pix2pix_pipeline.1} parent=91 // pred_check_branch
          %546 = sbr.rel (%p544) target = $region96
        $region95: #{au_pix2pix_pipeline.1} parent=91 // pred_region
          %548 = dma.done [#allocation3], 16
        $region96: #{au_pix2pix_pipeline.1} parent=91 // pred_fallthru
          _
        %549 = sfence
        %p550 = pneg %p46
        %p551 = pneg %p43
        %p552 = scmp.lt.s32.totalorder %s30, 1
        %s553 = scalar_select %p552, %s30, 1
        %s554 = smul.addr %s553, 4
        %s555 = scalar_lea.vmem %s1, %s554
        %p556 = pneg %p72
        %p557 = pneg %p69
        %p558 = scmp.lt.s32.totalorder %s30, 1
        %s559 = scalar_select %p558, %s30, 1
        %s560 = smul.addr %s559, 4
        %s561 = scalar_lea.vmem %s2, %s560
        %p562 = pneg %p98
        %p563 = pneg %p95
        %p564 = scmp.lt.s32.totalorder %s30, 1
        %s565 = scalar_select %p564, %s30, 1
        %s566 = smul.addr %s565, 4
        %s567 = smul.addr %s566, 8
        %s568 = scalar_lea.vmem %s3, %s567
        %p569 = pneg %p124
        %p570 = pneg %p121
        %p571 = pneg %p145
        %p572 = pneg %p142
        %p573 = pneg %p166
        %p574 = pneg %p163
        %p575 = pneg %p187
        %p576 = pneg %p184
        %p577 = pneg %p208
        %p578 = pneg %p205
        %p579 = pneg %p229
        %p580 = pneg %p226
        %p581 = pneg %p250
        %p582 = pneg %p247
        %p583 = pneg %p271
        %p584 = pneg %p268
        %p585 = pneg %p292
        %p586 = pneg %p289
        %p587 = pneg %p313
        %p588 = pneg %p310
        %p589 = pneg %p334
        %p590 = pneg %p331
        %p591 = pneg %p355
        %p592 = pneg %p352
        %p593 = pneg %p376
        %p594 = pneg %p373
        %p595 = pneg %p397
        %p596 = pneg %p394
        %p597 = pneg %p418
        %p598 = pneg %p415
        %p599 = pneg %p444
        %p600 = pneg %p441
        %p601 = scmp.lt.s32.totalorder %s30, 1
        %s602 = scalar_select %p601, %s30, 1
        %s603 = smul.addr %s602, 4
        %s604 = scalar_lea.vmem %s18, %s603
        %p605 = scmp.lt.s32.totalorder %s30, 1
        %s606 = scalar_select %p605, %s30, 1
        %s607 = smul.addr %s606, 4
        %s608 = scalar_lea.vmem %s1, %s607
        %p609 = scmp.lt.s32.totalorder %s30, 1
        %s610 = scalar_select %p609, %s30, 1
        %s611 = smul.addr %s610, 4
        %s612 = scalar_lea.vmem %s2, %s611
        %p613 = scmp.lt.s32.totalorder %s30, 1
        %s614 = scalar_select %p613, %s30, 1
        %s615 = smul.addr %s614, 4
        %s616 = smul.addr %s615, 8
        %s617 = scalar_lea.vmem %s3, %s616
        %p618 = scmp.lt.s32.totalorder %s30, 1
        %s619 = scalar_select %p618, %s30, 1
        %s620 = smul.addr %s619, 4
        %s621 = scalar_lea.vmem %s18, %s620
        %v622 = vld [vmem:[%s612] sm:$0xf]
        %v623 = vld [vmem:[%s617] sm:$0xff]
        %v624 = vld [vmem:[%s617 + $0x8] sm:$0xff]
        %v625 = vld [vmem:[%s617 + $0x10] sm:$0xff]
        %v626 = vld [vmem:[%s617 + $0x18] sm:$0xff]
        %v627 = vld [vmem:[%s4] sm:$0xff]
        %v628 = vld [vmem:[%s4 + $0x8] sm:$0xff]
        %v629 = vld [vmem:[%s4 + $0x10] sm:$0xff]
        %v630 = vld [vmem:[%s4 + $0x18] sm:$0xff]
        %v631 = vld [vmem:[%s9] sm:$0xff]
        %v632 = vld [vmem:[%s9 + $0x8] sm:$0xff]
        %v633 = vld [vmem:[%s9 + $0x10] sm:$0xff]
        %v634 = vld [vmem:[%s9 + $0x18] sm:$0xff]
        %vm635 = vcmask 261120
        %v637 = vsel %vm635, %v631, 0
        %v640 = vsel %vm635, %v632, 0
        %v643 = vsel %vm635, %v633, 0
        %v646 = vsel %vm635, %v634, 0
        %648 = vmatpush.msra.mxu0 0.0
        %649 = vmatpush.msra.mxu0 0.0
        %650 = vmatpush.msra.mxu0 0.0
        %651 = vmatpush.msra.mxu0 0.0
        %652 = vmatpush.msra.mxu0 0.0
        %653 = vmatpush.msra.mxu0 0.0
        %654 = vmatpush.msra.mxu0 0.0
        %655 = vmatpush.msra.mxu0 0.0
        %656 = vmatpush.msra.mxu0 0.0
        %657 = vmatpush.msra.mxu0 0.0
        %658 = vmatpush.msra.mxu0 0.0
        %659 = vmatpush.msra.mxu0 0.0
        %660 = vmatpush.msra.mxu0 %v626
        %661 = vmatpush.msra.mxu0 %v625
        %662 = vmatpush.msra.mxu0 %v624
        %663 = vmatpush.msra.mxu0 %v623
        %664 = vmatmul.f32.gmra.mxu0 %v637
        %v665 = vpop.f32.mrf.mxu0
        %v666 = vadd.f32 0.0, %v665
        %667 = vmatmul.f32.gmra.mxu0 %v640
        %v668 = vpop.f32.mrf.mxu0
        %v669 = vadd.f32 0.0, %v668
        %670 = vmatmul.f32.gmra.mxu0 %v643
        %v671 = vpop.f32.mrf.mxu0
        %v672 = vadd.f32 0.0, %v671
        %673 = vmatmul.f32.gmra.mxu0 %v646
        %v674 = vpop.f32.mrf.mxu0
        %v675 = vadd.f32 0.0, %v674
        %676 = vdwg.mxu0
        %v677 = vld [vmem:[%s10] sm:$0xff]
        %v678 = vld [vmem:[%s10 + $0x8] sm:$0xff]
        %v679 = vld [vmem:[%s10 + $0x10] sm:$0xff]
        %v680 = vld [vmem:[%s10 + $0x18] sm:$0xff]
        %v682 = vsel %vm635, %v677, 0
        %v685 = vsel %vm635, %v678, 0
        %v688 = vsel %vm635, %v679, 0
        %v691 = vsel %vm635, %v680, 0
        %693 = vmatpush.msra.mxu0 0.0
        %694 = vmatpush.msra.mxu0 0.0
        %695 = vmatpush.msra.mxu0 0.0
        %696 = vmatpush.msra.mxu0 0.0
        %697 = vmatpush.msra.mxu0 0.0
        %698 = vmatpush.msra.mxu0 0.0
        %699 = vmatpush.msra.mxu0 0.0
        %700 = vmatpush.msra.mxu0 0.0
        %701 = vmatpush.msra.mxu0 0.0
        %702 = vmatpush.msra.mxu0 0.0
        %703 = vmatpush.msra.mxu0 0.0
        %704 = vmatpush.msra.mxu0 0.0
        %705 = vmatpush.msra.mxu0 %v626
        %706 = vmatpush.msra.mxu0 %v625
        %707 = vmatpush.msra.mxu0 %v624
        %708 = vmatpush.msra.mxu0 %v623
        %709 = vmatmul.f32.gmra.mxu0 %v682
        %v710 = vpop.f32.mrf.mxu0
        %v711 = vadd.f32 0.0, %v710
        %712 = vmatmul.f32.gmra.mxu0 %v685
        %v713 = vpop.f32.mrf.mxu0
        %v714 = vadd.f32 0.0, %v713
        %715 = vmatmul.f32.gmra.mxu0 %v688
        %v716 = vpop.f32.mrf.mxu0
        %v717 = vadd.f32 0.0, %v716
        %718 = vmatmul.f32.gmra.mxu0 %v691
        %v719 = vpop.f32.mrf.mxu0
        %v720 = vadd.f32 0.0, %v719
        %721 = vdwg.mxu0
        %v722 = vld [vmem:[%s6] sm:$0xff]
        %v723 = vld [vmem:[%s6 + $0x8] sm:$0xff]
        %v724 = vld [vmem:[%s6 + $0x10] sm:$0xff]
        %v725 = vld [vmem:[%s6 + $0x18] sm:$0xff]
        %v726 = vld [vmem:[%s7] sm:$0xff]
        %v727 = vld [vmem:[%s7 + $0x8] sm:$0xff]
        %v728 = vld [vmem:[%s7 + $0x10] sm:$0xff]
        %v729 = vld [vmem:[%s7 + $0x18] sm:$0xff]
        %731 = vset.pattern.permute.xlu0 0
        %732 = vperm.xlu0 %731, %v726
        %v733 = vpop.permute.xlu0 %732
        %736 = vset.pattern.permute.xlu0 0
        %737 = vperm.xlu0 %736, %v727
        %v738 = vpop.permute.xlu0 %737
        %741 = vset.pattern.permute.xlu0 0
        %742 = vperm.xlu0 %741, %v728
        %v743 = vpop.permute.xlu0 %742
        %746 = vset.pattern.permute.xlu0 0
        %747 = vperm.xlu0 %746, %v729
        %v748 = vpop.permute.xlu0 %747
        %vm750 = vcmask 31744
        %v752 = vsel %vm750, %v722, 0
        %v755 = vsel %vm750, %v723, 0
        %v758 = vsel %vm750, %v724, 0
        %v761 = vsel %vm750, %v725, 0
        %vm763 = vcmask 1043456
        %v765 = vsel %vm763, %v622, 0
        %767 = vmatpush.msra.mxu0 0.0
        %768 = vmatpush.msra.mxu0 0.0
        %769 = vmatpush.msra.mxu0 0.0
        %770 = vmatpush.msra.mxu0 0.0
        %771 = vmatpush.msra.mxu0 0.0
        %772 = vmatpush.msra.mxu0 0.0
        %773 = vmatpush.msra.mxu0 0.0
        %774 = vmatpush.msra.mxu0 0.0
        %775 = vmatpush.msra.mxu0 0.0
        %776 = vmatpush.msra.mxu0 0.0
        %777 = vmatpush.msra.mxu0 0.0
        %778 = vmatpush.msra.mxu0 0.0
        %779 = vmatpush.msra.mxu0 0.0
        %780 = vmatpush.msra.mxu0 0.0
        %781 = vmatpush.msra.mxu0 0.0
        %782 = vmatpush.msra.mxu0 %v765
        %783 = vmatmul.f32.gmra.mxu0 %v752
        %v784 = vpop.f32.mrf.mxu0
        %v785 = vadd.f32 %v733, %v784
        %786 = vmatmul.f32.gmra.mxu0 %v755
        %v787 = vpop.f32.mrf.mxu0
        %v788 = vadd.f32 %v738, %v787
        %789 = vmatmul.f32.gmra.mxu0 %v758
        %v790 = vpop.f32.mrf.mxu0
        %v791 = vadd.f32 %v743, %v790
        %792 = vmatmul.f32.gmra.mxu0 %v761
        %v793 = vpop.f32.mrf.mxu0
        %v794 = vadd.f32 %v748, %v793
        %795 = vdwg.mxu0
        %v796 = vld [vmem:[%s5] sm:$0xff]
        %v797 = vld [vmem:[%s5 + $0x8] sm:$0xff]
        %v798 = vld [vmem:[%s5 + $0x10] sm:$0xff]
        %v799 = vld [vmem:[%s5 + $0x18] sm:$0xff]
        %v800 = vld [vmem:[%s8] sm:$0xff]
        %v801 = vld [vmem:[%s8 + $0x8] sm:$0xff]
        %v802 = vld [vmem:[%s8 + $0x10] sm:$0xff]
        %v803 = vld [vmem:[%s8 + $0x18] sm:$0xff]
        %v804 = vld [vmem:[%s11] sm:$0xff]
        %v805 = vld [vmem:[%s11 + $0x8] sm:$0xff]
        %v806 = vld [vmem:[%s11 + $0x10] sm:$0xff]
        %v807 = vld [vmem:[%s11 + $0x18] sm:$0xff]
        %v808 = vld [vmem:[%s12] sm:$0xff]
        %v809 = vld [vmem:[%s12 + $0x8] sm:$0xff]
        %v810 = vld [vmem:[%s12 + $0x10] sm:$0xff]
        %v811 = vld [vmem:[%s12 + $0x18] sm:$0xff]
        %v812 = vld [vmem:[%s12 + $0x20] sm:$0xff]
        %v813 = vld [vmem:[%s12 + $0x28] sm:$0xff]
        %v814 = vld [vmem:[%s12 + $0x30] sm:$0xff]
        %v815 = vld [vmem:[%s12 + $0x38] sm:$0xff]
        %v816 = vld [vmem:[%s13] sm:$0xff]
        %v817 = vld [vmem:[%s13 + $0x8] sm:$0xff]
        %v818 = vld [vmem:[%s13 + $0x10] sm:$0xff]
        %v819 = vld [vmem:[%s13 + $0x18] sm:$0xff]
        %v820 = vld [vmem:[%s13 + $0x20] sm:$0xff]
        %v821 = vld [vmem:[%s13 + $0x28] sm:$0xff]
        %v822 = vld [vmem:[%s13 + $0x30] sm:$0xff]
        %v823 = vld [vmem:[%s13 + $0x38] sm:$0xff]
        %v824 = vld [vmem:[%s14] sm:$0xff]
        %v825 = vld [vmem:[%s14 + $0x8] sm:$0xff]
        %v826 = vld [vmem:[%s14 + $0x10] sm:$0xff]
        %v827 = vld [vmem:[%s14 + $0x18] sm:$0xff]
        %v828 = vld [vmem:[%s15] sm:$0xff]
        %v829 = vld [vmem:[%s15 + $0x8] sm:$0xff]
        %v830 = vld [vmem:[%s15 + $0x10] sm:$0xff]
        %v831 = vld [vmem:[%s15 + $0x18] sm:$0xff]
        %v832 = vld [vmem:[%s16] sm:$0xf]
        %v833 = vld [vmem:[%s17] sm:$0xf]
        %v834 = vld [vmem:[%s608] sm:$0xf]
        loop: start=0, step=1, limit=50
        $region97: #{au_pix2pix_pipeline.1} parent=91 // loop_pre_header
          _
        $region98: #{au_pix2pix_pipeline.1} parent=91 // loop_header
          %s836 = sphi 0, %s840
          %p837 = scmp.ge.s32.totalorder %s836, 50
          %v841 = vphi %v834, %v1467
        $region99: #{au_pix2pix_pipeline.1} parent=91 // loop_header_branch
          %839 = sbr.rel (%p837) target = $region103
        $region100: #{au_pix2pix_pipeline.1} parent=91 // loop_body
          %v842 = vlaneseq
          %v843 = vshrl.u32 %v842, 7
          %v844 = vadd.s32 %v843, 8
          %v845 = vadd.s32 %v843, 16
          %v846 = vadd.s32 %v843, 24
          %v847 = vadd.s32 %v843, 32
          %v848 = vadd.s32 %v843, 40
          %v849 = vadd.s32 %v843, 48
          %v850 = vstv %s836
          %vm851 = vcmp.eq.s32.totalorder %v843, %v850
          %vm852 = vcmp.eq.s32.totalorder %v844, %v850
          %vm853 = vcmp.eq.s32.totalorder %v845, %v850
          %vm854 = vcmp.eq.s32.totalorder %v846, %v850
          %vm855 = vcmp.eq.s32.totalorder %v847, %v850
          %vm856 = vcmp.eq.s32.totalorder %v848, %v850
          %vm857 = vcmp.eq.s32.totalorder %v849, %v850
          %v858 = vsel %vm851, 1, 0
          %v859 = vsel %vm852, 1, 0
          %v860 = vsel %vm853, 1, 0
          %v861 = vsel %vm854, 1, 0
          %v862 = vsel %vm855, 1, 0
          %v863 = vsel %vm856, 1, 0
          %v864 = vsel %vm857, 1, 0
          %v865 = vcvt.s32.f32 %v858
          %v866 = vcvt.s32.f32 %v859
          %v867 = vcvt.s32.f32 %v860
          %v868 = vcvt.s32.f32 %v861
          %v869 = vcvt.s32.f32 %v862
          %v870 = vcvt.s32.f32 %v863
          %v871 = vcvt.s32.f32 %v864
          %vm872 = vcmask 408576
          %v874 = vsel %vm872, %v627, 0
          %v877 = vsel %vm872, %v628, 0
          %v880 = vsel %vm872, %v629, 0
          %v883 = vsel %vm872, %v630, 0
          %vm885 = vcmask 1041408
          %v887 = vsel %vm885, %v871, 0
          %889 = vmatpush.msra.mxu0 0.0
          %890 = vmatpush.msra.mxu0 0.0
          %891 = vmatpush.msra.mxu0 0.0
          %892 = vmatpush.msra.mxu0 0.0
          %893 = vmatpush.msra.mxu0 0.0
          %894 = vmatpush.msra.mxu0 0.0
          %895 = vmatpush.msra.mxu0 0.0
          %896 = vmatpush.msra.mxu0 0.0
          %897 = vmatpush.msra.mxu0 0.0
          %898 = vmatpush.msra.mxu0 %v887
          %899 = vmatpush.msra.mxu0 %v870
          %900 = vmatpush.msra.mxu0 %v869
          %901 = vmatpush.msra.mxu0 %v868
          %902 = vmatpush.msra.mxu0 %v867
          %903 = vmatpush.msra.mxu0 %v866
          %904 = vmatpush.msra.mxu0 %v865
          %905 = vmatmul.f32.gmra.mxu0 %v874
          %v906 = vpop.f32.mrf.mxu0
          %v907 = vadd.f32 0.0, %v906
          %908 = vmatmul.f32.gmra.mxu0 %v877
          %v909 = vpop.f32.mrf.mxu0
          %v910 = vadd.f32 0.0, %v909
          %911 = vmatmul.f32.gmra.mxu0 %v880
          %v912 = vpop.f32.mrf.mxu0
          %v913 = vadd.f32 0.0, %v912
          %914 = vmatmul.f32.gmra.mxu0 %v883
          %v915 = vpop.f32.mrf.mxu0
          %v916 = vadd.f32 0.0, %v915
          %917 = vdwg.mxu0
          %v919 = vsel %vm750, %v796, 0
          %v922 = vsel %vm750, %v797, 0
          %v925 = vsel %vm750, %v798, 0
          %v928 = vsel %vm750, %v799, 0
          %v931 = vsel %vm763, %v841, 0
          %933 = vmatpush.msra.mxu0 0.0
          %934 = vmatpush.msra.mxu0 0.0
          %935 = vmatpush.msra.mxu0 0.0
          %936 = vmatpush.msra.mxu0 0.0
          %937 = vmatpush.msra.mxu0 0.0
          %938 = vmatpush.msra.mxu0 0.0
          %939 = vmatpush.msra.mxu0 0.0
          %940 = vmatpush.msra.mxu0 0.0
          %941 = vmatpush.msra.mxu0 0.0
          %942 = vmatpush.msra.mxu0 0.0
          %943 = vmatpush.msra.mxu0 0.0
          %944 = vmatpush.msra.mxu0 0.0
          %945 = vmatpush.msra.mxu0 0.0
          %946 = vmatpush.msra.mxu0 0.0
          %947 = vmatpush.msra.mxu0 0.0
          %948 = vmatpush.msra.mxu0 %v931
          %949 = vmatmul.f32.gmra.mxu0 %v919
          %v950 = vpop.f32.mrf.mxu0
          %v951 = vadd.f32 %v785, %v950
          %952 = vmatmul.f32.gmra.mxu0 %v922
          %v953 = vpop.f32.mrf.mxu0
          %v954 = vadd.f32 %v788, %v953
          %955 = vmatmul.f32.gmra.mxu0 %v925
          %v956 = vpop.f32.mrf.mxu0
          %v957 = vadd.f32 %v791, %v956
          %958 = vmatmul.f32.gmra.mxu0 %v928
          %v959 = vpop.f32.mrf.mxu0
          %v960 = vadd.f32 %v794, %v959
          %961 = vdwg.mxu0
          %963 = vset.pattern.permute.xlu0 0
          %964 = vperm.xlu0 %963, %v907
          %v965 = vpop.permute.xlu0 %964
          %968 = vset.pattern.permute.xlu0 0
          %969 = vperm.xlu0 %968, %v910
          %v970 = vpop.permute.xlu0 %969
          %973 = vset.pattern.permute.xlu0 0
          %974 = vperm.xlu0 %973, %v913
          %v975 = vpop.permute.xlu0 %974
          %978 = vset.pattern.permute.xlu0 0
          %979 = vperm.xlu0 %978, %v916
          %v980 = vpop.permute.xlu0 %979
          %v982 = vadd.f32 %v951, %v965
          %v983 = vadd.f32 %v954, %v970
          %v984 = vadd.f32 %v957, %v975
          %v985 = vadd.f32 %v960, %v980
          %v987 = vsel %vm635, %v800, 0
          %v990 = vsel %vm635, %v801, 0
          %v993 = vsel %vm635, %v802, 0
          %v996 = vsel %vm635, %v803, 0
          %998 = vmatpush.msra.mxu0 0.0
          %999 = vmatpush.msra.mxu0 0.0
          %1000 = vmatpush.msra.mxu0 0.0
          %1001 = vmatpush.msra.mxu0 0.0
          %1002 = vmatpush.msra.mxu0 0.0
          %1003 = vmatpush.msra.mxu0 0.0
          %1004 = vmatpush.msra.mxu0 0.0
          %1005 = vmatpush.msra.mxu0 0.0
          %1006 = vmatpush.msra.mxu0 0.0
          %1007 = vmatpush.msra.mxu0 0.0
          %1008 = vmatpush.msra.mxu0 0.0
          %1009 = vmatpush.msra.mxu0 0.0
          %1010 = vmatpush.msra.mxu0 %v985
          %1011 = vmatpush.msra.mxu0 %v984
          %1012 = vmatpush.msra.mxu0 %v983
          %1013 = vmatpush.msra.mxu0 %v982
          %1014 = vmatmul.f32.gmra.mxu0 %v987
          %v1015 = vpop.f32.mrf.mxu0
          %v1016 = vadd.f32 0.0, %v1015
          %1017 = vmatmul.f32.gmra.mxu0 %v990
          %v1018 = vpop.f32.mrf.mxu0
          %v1019 = vadd.f32 0.0, %v1018
          %1020 = vmatmul.f32.gmra.mxu0 %v993
          %v1021 = vpop.f32.mrf.mxu0
          %v1022 = vadd.f32 0.0, %v1021
          %1023 = vmatmul.f32.gmra.mxu0 %v996
          %v1024 = vpop.f32.mrf.mxu0
          %v1025 = vadd.f32 0.0, %v1024
          %1026 = vdwg.mxu0
          %1027 = vxpose.xlu0.b32.start [1/16] %v666, 128
          %1028 = vxpose.xlu0.b32.cont [2/16] %v669, 128
          %1029 = vxpose.xlu0.b32.cont [3/16] %v672, 128
          %1030 = vxpose.xlu0.b32.cont [4/16] %v675, 128
          %1031 = vxpose.xlu0.b32.cont [5/16] 0.0, 128
          %1032 = vxpose.xlu0.b32.cont [6/16] 0.0, 128
          %1033 = vxpose.xlu0.b32.cont [7/16] 0.0, 128
          %1034 = vxpose.xlu0.b32.cont [8/16] 0.0, 128
          %1035 = vxpose.xlu0.b32.cont [9/16] 0.0, 128
          %1036 = vxpose.xlu0.b32.cont [10/16] 0.0, 128
          %1037 = vxpose.xlu0.b32.cont [11/16] 0.0, 128
          %1038 = vxpose.xlu0.b32.cont [12/16] 0.0, 128
          %1039 = vxpose.xlu0.b32.cont [13/16] 0.0, 128
          %1040 = vxpose.xlu0.b32.cont [14/16] 0.0, 128
          %1041 = vxpose.xlu0.b32.cont [15/16] 0.0, 128
          %1042 = vxpose.xlu0.b32.end [16/16] 0.0, 128
          %v1043 = vpop.trf.xlu0
          %v1044 = vpop.trf.xlu0
          %v1045 = vpop.trf.xlu0
          %v1046 = vpop.trf.xlu0
          %v1047 = vpop.trf.xlu0
          %v1048 = vpop.trf.xlu0
          %v1049 = vpop.trf.xlu0
          %v1050 = vpop.trf.xlu0
          %v1051 = vpop.trf.xlu0
          %v1052 = vpop.trf.xlu0
          %v1053 = vpop.trf.xlu0
          %v1054 = vpop.trf.xlu0
          %v1055 = vpop.trf.xlu0
          %v1056 = vpop.trf.xlu0
          %v1057 = vpop.trf.xlu0
          %v1058 = vpop.trf.xlu0
          %v1060 = vsel %vm635, %v1043, 0
          %1062 = vmatpush.msra.mxu0 0.0
          %1063 = vmatpush.msra.mxu0 0.0
          %1064 = vmatpush.msra.mxu0 0.0
          %1065 = vmatpush.msra.mxu0 0.0
          %1066 = vmatpush.msra.mxu0 0.0
          %1067 = vmatpush.msra.mxu0 0.0
          %1068 = vmatpush.msra.mxu0 0.0
          %1069 = vmatpush.msra.mxu0 0.0
          %1070 = vmatpush.msra.mxu0 0.0
          %1071 = vmatpush.msra.mxu0 0.0
          %1072 = vmatpush.msra.mxu0 0.0
          %1073 = vmatpush.msra.mxu0 0.0
          %1074 = vmatpush.msra.mxu0 %v1025
          %1075 = vmatpush.msra.mxu0 %v1022
          %1076 = vmatpush.msra.mxu0 %v1019
          %1077 = vmatpush.msra.mxu0 %v1016
          %1078 = vmatmul.f32.gmra.mxu0 %v1060
          %v1079 = vpop.f32.mrf.mxu0
          %v1080 = vadd.f32 0.0, %v1079
          %1081 = vdwg.mxu0
          %v1082 = vmul.f32 %v1080, 0.17677669
          %vm1083 = vcmask 523264
          %v1084 = vsel %vm1083, %v1082, -inf
          %v1085 = vrot.slane %v1084, 4
          %v1086 = vmax.f32 %v1084, %v1085
          %v1087 = vrot.slane %v1086, 2
          %v1088 = vmax.f32 %v1086, %v1087
          %v1089 = vrot.slane %v1088, 1
          %v1090 = vmax.f32 %v1088, %v1089
          %v1091 = vsub.f32 %v1082, %v1090
          %v1092 = vmul.f32 %v1091, 1.442695
          %v1093 = vpow.pop %v1092
          %v1094 = vsel %vm1083, %v1093, 0.0
          %v1095 = vrot.slane %v1094, 4
          %v1096 = vadd.f32 %v1094, %v1095
          %v1097 = vrot.slane %v1096, 2
          %v1098 = vadd.f32 %v1096, %v1097
          %v1099 = vrot.slane %v1098, 1
          %v1100 = vadd.f32 %v1098, %v1099
          %v1101 = vrcp.pop %v1100
          %v1102 = vmul.f32 %v1093, %v1101
          %vm1103 = vcmask 64512
          %v1105 = vsel %vm1103, %v711, 0
          %v1108 = vsel %vm1103, %v714, 0
          %v1111 = vsel %vm1103, %v717, 0
          %v1114 = vsel %vm1103, %v720, 0
          %1116 = vmatpush.msra.mxu0 0.0
          %1117 = vmatpush.msra.mxu0 0.0
          %1118 = vmatpush.msra.mxu0 0.0
          %1119 = vmatpush.msra.mxu0 0.0
          %1120 = vmatpush.msra.mxu0 0.0
          %1121 = vmatpush.msra.mxu0 0.0
          %1122 = vmatpush.msra.mxu0 0.0
          %1123 = vmatpush.msra.mxu0 0.0
          %1124 = vmatpush.msra.mxu0 0.0
          %1125 = vmatpush.msra.mxu0 0.0
          %1126 = vmatpush.msra.mxu0 0.0
          %1127 = vmatpush.msra.mxu0 0.0
          %1128 = vmatpush.msra.mxu0 0.0
          %1129 = vmatpush.msra.mxu0 0.0
          %1130 = vmatpush.msra.mxu0 0.0
          %1131 = vmatpush.msra.mxu0 %v1102
          %1132 = vmatmul.f32.gmra.mxu0 %v1105
          %v1133 = vpop.f32.mrf.mxu0
          %v1134 = vadd.f32 0.0, %v1133
          %1135 = vmatmul.f32.gmra.mxu0 %v1108
          %v1136 = vpop.f32.mrf.mxu0
          %v1137 = vadd.f32 0.0, %v1136
          %1138 = vmatmul.f32.gmra.mxu0 %v1111
          %v1139 = vpop.f32.mrf.mxu0
          %v1140 = vadd.f32 0.0, %v1139
          %1141 = vmatmul.f32.gmra.mxu0 %v1114
          %v1142 = vpop.f32.mrf.mxu0
          %v1143 = vadd.f32 0.0, %v1142
          %1144 = vdwg.mxu0
          %v1146 = vsel %vm635, %v804, 0
          %v1149 = vsel %vm635, %v805, 0
          %v1152 = vsel %vm635, %v806, 0
          %v1155 = vsel %vm635, %v807, 0
          %1157 = vmatpush.msra.mxu0 0.0
          %1158 = vmatpush.msra.mxu0 0.0
          %1159 = vmatpush.msra.mxu0 0.0
          %1160 = vmatpush.msra.mxu0 0.0
          %1161 = vmatpush.msra.mxu0 0.0
          %1162 = vmatpush.msra.mxu0 0.0
          %1163 = vmatpush.msra.mxu0 0.0
          %1164 = vmatpush.msra.mxu0 0.0
          %1165 = vmatpush.msra.mxu0 0.0
          %1166 = vmatpush.msra.mxu0 0.0
          %1167 = vmatpush.msra.mxu0 0.0
          %1168 = vmatpush.msra.mxu0 0.0
          %1169 = vmatpush.msra.mxu0 %v1143
          %1170 = vmatpush.msra.mxu0 %v1140
          %1171 = vmatpush.msra.mxu0 %v1137
          %1172 = vmatpush.msra.mxu0 %v1134
          %1173 = vmatmul.f32.gmra.mxu0 %v1146
          %v1174 = vpop.f32.mrf.mxu0
          %v1175 = vadd.f32 0.0, %v1174
          %1176 = vmatmul.f32.gmra.mxu0 %v1149
          %v1177 = vpop.f32.mrf.mxu0
          %v1178 = vadd.f32 0.0, %v1177
          %1179 = vmatmul.f32.gmra.mxu0 %v1152
          %v1180 = vpop.f32.mrf.mxu0
          %v1181 = vadd.f32 0.0, %v1180
          %1182 = vmatmul.f32.gmra.mxu0 %v1155
          %v1183 = vpop.f32.mrf.mxu0
          %v1184 = vadd.f32 0.0, %v1183
          %1185 = vdwg.mxu0
          %v1186 = vadd.f32 %v982, %v1175
          %v1187 = vadd.f32 %v983, %v1178
          %v1188 = vadd.f32 %v984, %v1181
          %v1189 = vadd.f32 %v985, %v1184
          %1191 = vset.pattern.permute.xlu0 0
          %1192 = vperm.xlu0 %1191, %v816
          %v1193 = vpop.permute.xlu0 %1192
          %1196 = vset.pattern.permute.xlu0 0
          %1197 = vperm.xlu0 %1196, %v817
          %v1198 = vpop.permute.xlu0 %1197
          %1201 = vset.pattern.permute.xlu0 0
          %1202 = vperm.xlu0 %1201, %v818
          %v1203 = vpop.permute.xlu0 %1202
          %1206 = vset.pattern.permute.xlu0 0
          %1207 = vperm.xlu0 %1206, %v819
          %v1208 = vpop.permute.xlu0 %1207
          %1211 = vset.pattern.permute.xlu0 0
          %1212 = vperm.xlu0 %1211, %v820
          %v1213 = vpop.permute.xlu0 %1212
          %1216 = vset.pattern.permute.xlu0 0
          %1217 = vperm.xlu0 %1216, %v821
          %v1218 = vpop.permute.xlu0 %1217
          %1221 = vset.pattern.permute.xlu0 0
          %1222 = vperm.xlu0 %1221, %v822
          %v1223 = vpop.permute.xlu0 %1222
          %1226 = vset.pattern.permute.xlu0 0
          %1227 = vperm.xlu0 %1226, %v823
          %v1228 = vpop.permute.xlu0 %1227
          %v1231 = vsel %vm635, %v808, 0
          %v1234 = vsel %vm635, %v809, 0
          %v1237 = vsel %vm635, %v810, 0
          %v1240 = vsel %vm635, %v811, 0
          %v1243 = vsel %vm635, %v812, 0
          %v1246 = vsel %vm635, %v813, 0
          %v1249 = vsel %vm635, %v814, 0
          %v1252 = vsel %vm635, %v815, 0
          %1254 = vmatpush.msra.mxu0 0.0
          %1255 = vmatpush.msra.mxu0 0.0
          %1256 = vmatpush.msra.mxu0 0.0
          %1257 = vmatpush.msra.mxu0 0.0
          %1258 = vmatpush.msra.mxu0 0.0
          %1259 = vmatpush.msra.mxu0 0.0
          %1260 = vmatpush.msra.mxu0 0.0
          %1261 = vmatpush.msra.mxu0 0.0
          %1262 = vmatpush.msra.mxu0 0.0
          %1263 = vmatpush.msra.mxu0 0.0
          %1264 = vmatpush.msra.mxu0 0.0
          %1265 = vmatpush.msra.mxu0 0.0
          %1266 = vmatpush.msra.mxu0 %v1189
          %1267 = vmatpush.msra.mxu0 %v1188
          %1268 = vmatpush.msra.mxu0 %v1187
          %1269 = vmatpush.msra.mxu0 %v1186
          %1270 = vmatmul.f32.gmra.mxu0 %v1231
          %v1271 = vpop.f32.mrf.mxu0
          %v1272 = vadd.f32 %v1193, %v1271
          %1273 = vmatmul.f32.gmra.mxu0 %v1234
          %v1274 = vpop.f32.mrf.mxu0
          %v1275 = vadd.f32 %v1198, %v1274
          %1276 = vmatmul.f32.gmra.mxu0 %v1237
          %v1277 = vpop.f32.mrf.mxu0
          %v1278 = vadd.f32 %v1203, %v1277
          %1279 = vmatmul.f32.gmra.mxu0 %v1240
          %v1280 = vpop.f32.mrf.mxu0
          %v1281 = vadd.f32 %v1208, %v1280
          %1282 = vmatmul.f32.gmra.mxu0 %v1243
          %v1283 = vpop.f32.mrf.mxu0
          %v1284 = vadd.f32 %v1213, %v1283
          %1285 = vmatmul.f32.gmra.mxu0 %v1246
          %v1286 = vpop.f32.mrf.mxu0
          %v1287 = vadd.f32 %v1218, %v1286
          %1288 = vmatmul.f32.gmra.mxu0 %v1249
          %v1289 = vpop.f32.mrf.mxu0
          %v1290 = vadd.f32 %v1223, %v1289
          %1291 = vmatmul.f32.gmra.mxu0 %v1252
          %v1292 = vpop.f32.mrf.mxu0
          %v1293 = vadd.f32 %v1228, %v1292
          %1294 = vdwg.mxu0
          %v1295 = vmul.f32 %v1272, %v1272
          %v1296 = vmul.f32 %v1275, %v1275
          %v1297 = vmul.f32 %v1278, %v1278
          %v1298 = vmul.f32 %v1281, %v1281
          %v1299 = vmul.f32 %v1284, %v1284
          %v1300 = vmul.f32 %v1287, %v1287
          %v1301 = vmul.f32 %v1290, %v1290
          %v1302 = vmul.f32 %v1293, %v1293
          %v1303 = vmul.f32 %v1272, %v1295
          %v1304 = vmul.f32 %v1275, %v1296
          %v1305 = vmul.f32 %v1278, %v1297
          %v1306 = vmul.f32 %v1281, %v1298
          %v1307 = vmul.f32 %v1284, %v1299
          %v1308 = vmul.f32 %v1287, %v1300
          %v1309 = vmul.f32 %v1290, %v1301
          %v1310 = vmul.f32 %v1293, %v1302
          %v1311 = vmul.f32 %v1303, 0.044715
          %v1312 = vmul.f32 %v1304, 0.044715
          %v1313 = vmul.f32 %v1305, 0.044715
          %v1314 = vmul.f32 %v1306, 0.044715
          %v1315 = vmul.f32 %v1307, 0.044715
          %v1316 = vmul.f32 %v1308, 0.044715
          %v1317 = vmul.f32 %v1309, 0.044715
          %v1318 = vmul.f32 %v1310, 0.044715
          %v1319 = vadd.f32 %v1272, %v1311
          %v1320 = vadd.f32 %v1275, %v1312
          %v1321 = vadd.f32 %v1278, %v1313
          %v1322 = vadd.f32 %v1281, %v1314
          %v1323 = vadd.f32 %v1284, %v1315
          %v1324 = vadd.f32 %v1287, %v1316
          %v1325 = vadd.f32 %v1290, %v1317
          %v1326 = vadd.f32 %v1293, %v1318
          %v1327 = vmul.f32 %v1319, 0.7978846
          %v1328 = vmul.f32 %v1320, 0.7978846
          %v1329 = vmul.f32 %v1321, 0.7978846
          %v1330 = vmul.f32 %v1322, 0.7978846
          %v1331 = vmul.f32 %v1323, 0.7978846
          %v1332 = vmul.f32 %v1324, 0.7978846
          %v1333 = vmul.f32 %v1325, 0.7978846
          %v1334 = vmul.f32 %v1326, 0.7978846
          %v1335 = vtanh.pop %v1327
          %v1336 = vtanh.pop %v1328
          %v1337 = vtanh.pop %v1329
          %v1338 = vtanh.pop %v1330
          %v1339 = vtanh.pop %v1331
          %v1340 = vtanh.pop %v1332
          %v1341 = vtanh.pop %v1333
          %v1342 = vtanh.pop %v1334
          %v1343 = vadd.f32 %v1335, 1.0
          %v1344 = vadd.f32 %v1336, 1.0
          %v1345 = vadd.f32 %v1337, 1.0
          %v1346 = vadd.f32 %v1338, 1.0
          %v1347 = vadd.f32 %v1339, 1.0
          %v1348 = vadd.f32 %v1340, 1.0
          %v1349 = vadd.f32 %v1341, 1.0
          %v1350 = vadd.f32 %v1342, 1.0
          %v1351 = vmul.f32 %v1343, 0.5
          %v1352 = vmul.f32 %v1344, 0.5
          %v1353 = vmul.f32 %v1345, 0.5
          %v1354 = vmul.f32 %v1346, 0.5
          %v1355 = vmul.f32 %v1347, 0.5
          %v1356 = vmul.f32 %v1348, 0.5
          %v1357 = vmul.f32 %v1349, 0.5
          %v1358 = vmul.f32 %v1350, 0.5
          %v1359 = vmul.f32 %v1272, %v1351
          %v1360 = vmul.f32 %v1275, %v1352
          %v1361 = vmul.f32 %v1278, %v1353
          %v1362 = vmul.f32 %v1281, %v1354
          %v1363 = vmul.f32 %v1284, %v1355
          %v1364 = vmul.f32 %v1287, %v1356
          %v1365 = vmul.f32 %v1290, %v1357
          %v1366 = vmul.f32 %v1293, %v1358
          %v1368 = vsel %vm1083, %v824, 0
          %v1371 = vsel %vm1083, %v825, 0
          %v1374 = vsel %vm1083, %v826, 0
          %v1377 = vsel %vm1083, %v827, 0
          %1379 = vmatpush.msra.mxu0 0.0
          %1380 = vmatpush.msra.mxu0 0.0
          %1381 = vmatpush.msra.mxu0 0.0
          %1382 = vmatpush.msra.mxu0 0.0
          %1383 = vmatpush.msra.mxu0 0.0
          %1384 = vmatpush.msra.mxu0 0.0
          %1385 = vmatpush.msra.mxu0 0.0
          %1386 = vmatpush.msra.mxu0 0.0
          %1387 = vmatpush.msra.mxu0 %v1366
          %1388 = vmatpush.msra.mxu0 %v1365
          %1389 = vmatpush.msra.mxu0 %v1364
          %1390 = vmatpush.msra.mxu0 %v1363
          %1391 = vmatpush.msra.mxu0 %v1362
          %1392 = vmatpush.msra.mxu0 %v1361
          %1393 = vmatpush.msra.mxu0 %v1360
          %1394 = vmatpush.msra.mxu0 %v1359
          %1395 = vmatmul.f32.gmra.mxu0 %v1368
          %v1396 = vpop.f32.mrf.mxu0
          %v1397 = vadd.f32 0.0, %v1396
          %1398 = vmatmul.f32.gmra.mxu0 %v1371
          %v1399 = vpop.f32.mrf.mxu0
          %v1400 = vadd.f32 0.0, %v1399
          %1401 = vmatmul.f32.gmra.mxu0 %v1374
          %v1402 = vpop.f32.mrf.mxu0
          %v1403 = vadd.f32 0.0, %v1402
          %1404 = vmatmul.f32.gmra.mxu0 %v1377
          %v1405 = vpop.f32.mrf.mxu0
          %v1406 = vadd.f32 0.0, %v1405
          %1407 = vdwg.mxu0
          %v1408 = vadd.f32 %v1186, %v1397
          %v1409 = vadd.f32 %v1187, %v1400
          %v1410 = vadd.f32 %v1188, %v1403
          %v1411 = vadd.f32 %v1189, %v1406
          %1413 = vset.pattern.permute.xlu0 0
          %1414 = vperm.xlu0 %1413, %v828
          %v1415 = vpop.permute.xlu0 %1414
          %1418 = vset.pattern.permute.xlu0 0
          %1419 = vperm.xlu0 %1418, %v829
          %v1420 = vpop.permute.xlu0 %1419
          %1423 = vset.pattern.permute.xlu0 0
          %1424 = vperm.xlu0 %1423, %v830
          %v1425 = vpop.permute.xlu0 %1424
          %1428 = vset.pattern.permute.xlu0 0
          %1429 = vperm.xlu0 %1428, %v831
          %v1430 = vpop.permute.xlu0 %1429
          %v1432 = vadd.f32 %v1408, %v1415
          %v1433 = vadd.f32 %v1409, %v1420
          %v1434 = vadd.f32 %v1410, %v1425
          %v1435 = vadd.f32 %v1411, %v1430
          %1437 = vset.pattern.permute.xlu0 0
          %1438 = vperm.xlu0 %1437, %v833
          %v1439 = vpop.permute.xlu0 %1438
          %v1442 = vsel %vm635, %v832, 0
          %1444 = vmatpush.msra.mxu0 0.0
          %1445 = vmatpush.msra.mxu0 0.0
          %1446 = vmatpush.msra.mxu0 0.0
          %1447 = vmatpush.msra.mxu0 0.0
          %1448 = vmatpush.msra.mxu0 0.0
          %1449 = vmatpush.msra.mxu0 0.0
          %1450 = vmatpush.msra.mxu0 0.0
          %1451 = vmatpush.msra.mxu0 0.0
          %1452 = vmatpush.msra.mxu0 0.0
          %1453 = vmatpush.msra.mxu0 0.0
          %1454 = vmatpush.msra.mxu0 0.0
          %1455 = vmatpush.msra.mxu0 0.0
          %1456 = vmatpush.msra.mxu0 %v1435
          %1457 = vmatpush.msra.mxu0 %v1434
          %1458 = vmatpush.msra.mxu0 %v1433
          %1459 = vmatpush.msra.mxu0 %v1432
          %1460 = vmatmul.f32.gmra.mxu0 %v1442
          %v1461 = vpop.f32.mrf.mxu0
          %v1462 = vadd.f32 %v1439, %v1461
          %1463 = vdwg.mxu0
          %s1464 = sld [smem:[#allocation2 + %s836]]
          %v1465 = vstv %s1464
          %v1466 = vmul.f32 %v1465, %v1462
          %v1467 = vadd.f32 %v841, %v1466
        $region101: #{au_pix2pix_pipeline.1} parent=91 // loop_footer
          %s840 = sadd.s32 1, %s836
        $region102: #{au_pix2pix_pipeline.1} parent=91 // loop_footer_branch
          %835 = sbr.rel target = $region98
        $region103: #{au_pix2pix_pipeline.1} parent=91 // loop_exit
          _
        %vm1468 = vcmask 519168
        %1469 = vst.msk [vmem:[%s621] sm:$0xf] %vm1468, %v841
        %p1470 = scmp.lt.s32.totalorder %s30, 1
        %s1471 = scalar_select %p1470, %s30, 1
        %s1472 = smul.addr %s1471, 4
        %s1473 = scalar_lea.vmem %s18, %s1472
        // Predicated region
        $region104: #{au_pix2pix_pipeline.1} parent=91 // pred_check
          %p1474 = pneg %p441
        $region105: #{au_pix2pix_pipeline.1} parent=91 // pred_check_branch
          %1476 = sbr.rel (%p1474) target = $region107
        $region106: #{au_pix2pix_pipeline.1} parent=91 // pred_region
          _
        $region107: #{au_pix2pix_pipeline.1} parent=91 // pred_fallthru
          _
      $region92: #{au_pix2pix_pipeline.1} parent=5 // pred_fallthru
        _
      %p1477 = scmp.le.s32.totalorder 2, %s25
      // Predicated region
      $region108: #{au_pix2pix_pipeline.1} parent=5 // pred_check
        %p1478 = pneg %p1477
      $region109: #{au_pix2pix_pipeline.1} parent=5 // pred_check_branch
        %1480 = sbr.rel (%p1478) target = $region111
      $region110: #{au_pix2pix_pipeline.1} parent=5 // pred_region
        %s1481 = ssub.s32 %s25, 2
        // Predicated region
        $region112: #{au_pix2pix_pipeline.1} parent=110 // pred_check
          %p1482 = pneg %p447
        $region113: #{au_pix2pix_pipeline.1} parent=110 // pred_check_branch
          %1484 = sbr.rel (%p1482) target = $region115
        $region114: #{au_pix2pix_pipeline.1} parent=110 // pred_region
          %p1485 = scmp.lt.s32.totalorder %s31, 1
          %s1486 = scalar_select %p1485, %s31, 1
          %s1487 = smul.addr %s1486, 4
          %s1488 = scalar_lea.vmem %s18, %s1487
        $region115: #{au_pix2pix_pipeline.1} parent=110 // pred_fallthru
          _
      $region111: #{au_pix2pix_pipeline.1} parent=5 // pred_fallthru
        _
    $region6: #{au_pix2pix_pipeline.1} parent=1 // loop_footer
      %s29 = sadd.s32 1, %s25
    $region7: #{au_pix2pix_pipeline.1} parent=1 // loop_footer_branch
      %24 = sbr.rel target = $region3
    $region8: #{au_pix2pix_pipeline.1} parent=1 // loop_exit
      _
    %1489 = vsyncpa [#allocation3], 1
    %s1490 = scalar_lea.sflag [#allocation3], 1
    %1491 = vsyncpa %s1490, 1

</llo_original>
